<compile_context>
chip_gen: v7x
topology: tpu7x:2x2x1
jax: 0.10.0
libtpu: 0.0.40
codegen_flags: <defaults>
</compile_context>

<pallas_src>
import jax
import jax.numpy as jnp
import numpy as np
from jax.experimental import pallas as pl
from jax.experimental.pallas import tpu as pltpu

# ---- small, module-consistent sizes ----
B = 2          # batch
S = 8          # sequence length
H = 32         # hidden size (stands in for 768)
L = 5          # num_label = num_labels + 1
VOCAB = 100    # stand-in vocab size
G = 4 * H      # per-direction gate width


# ------------------------------------------------------------------
# Fused kernel: bidirectional LSTM (PyTorch gate order i, f, g, o)
#   + span pairing + logits linear + softmax, all in one invocation.
# span_logits[b,i,j,:] = W1 @ enc[b,i] + W2 @ enc[b,j] + bias   (exact)
# computed transposed / lane-dense as (L, B*S*S).
# ------------------------------------------------------------------
def fused_kernel(x_ref, wih_ref, whh_ref, b_ref, w1t_ref, w2t_ref, bl_ref,
                 e1_ref, e2_ref, out_ref):
    # x_ref   : (S*B, H)     time-major rows (row p = t*B + b)
    # wih_ref : (H, 8H)      [fwd i,f,2*g,o | bwd i,f,2*g,o]
    # whh_ref : (2H, 8H)     block-diagonal, g columns pre-scaled by 2
    # b_ref   : (1, 8H)
    # w1t_ref : (L, 2H)      "start" half of the logits weight
    # w2t_ref : (L, 2H)      "end" half
    # bl_ref  : (L, 1)
    # e1_ref, e2_ref : (S*B, B*S*S)  0/1 lane-expansion matrices
    # out_ref : (L, B*S*S)   lane-dense span softmax

    # ---- input projection for BOTH directions, all positions at once ----
    xg = (jnp.dot(x_ref[...], wih_ref[...],
                  preferred_element_type=jnp.float32) + b_ref[...])      # (S*B, 8H)
    whh = whh_ref[...]                                                   # (2H, 8H)

    h_f = jnp.zeros((B, H), jnp.float32)
    c_f = jnp.zeros((B, H), jnp.float32)
    h_b = jnp.zeros((B, H), jnp.float32)
    c_b = jnp.zeros((B, H), jnp.float32)
    hs_f = [None] * S
    hs_b = [None] * S

    # Fully-unrolled, direction-interleaved recurrence (static S).
    for t in range(S):
        tb = S - 1 - t
        h_cat = jnp.concatenate([h_f, h_b], axis=1)                      # (B, 2H)
        rec = jnp.dot(h_cat, whh, preferred_element_type=jnp.float32)    # (B, 8H)

        g_f = xg[t * B:(t + 1) * B, 0:G] + rec[:, 0:G]                   # (B, 4H)
        g_b = xg[tb * B:(tb + 1) * B, G:2 * G] + rec[:, G:2 * G]         # (B, 4H)

        # one sigmoid per direction over the whole 4H gate vector (one vreg);
        # the g gate comes back as tanh(z) = 2*sigmoid(2z) - 1 (weights were
        # pre-scaled by 2 in the wrapper) -- pure VPU fixup.
        s_f = jax.nn.sigmoid(g_f)
        s_b = jax.nn.sigmoid(g_b)
        c_f = (s_f[:, H:2 * H] * c_f
               + s_f[:, 0:H] * (2.0 * s_f[:, 2 * H:3 * H] - 1.0))
        c_b = (s_b[:, H:2 * H] * c_b
               + s_b[:, 0:H] * (2.0 * s_b[:, 2 * H:3 * H] - 1.0))

        tc = jnp.tanh(jnp.concatenate([c_f, c_b], axis=1))               # (B, 2H)
        h_f = s_f[:, 3 * H:4 * H] * tc[:, 0:H]
        h_b = s_b[:, 3 * H:4 * H] * tc[:, H:2 * H]

        hs_f[t] = h_f
        hs_b[tb] = h_b

    # ---- assemble enc entirely in vregs (no VMEM scratch round-trip) ----
    enc_f = jnp.concatenate(hs_f, axis=0)          # (S*B, H), row p = t*B + b
    enc_b = jnp.concatenate(hs_b, axis=0)          # (S*B, H)
    enc = jnp.concatenate([enc_f, enc_b], axis=1)  # (S*B, 2H)
    enc_t = enc.T                                  # (2H, S*B)

    # ---- lane-dense span logits: (L, S*B) expanded to (L, B*S*S) ----
    a_t = jnp.dot(w1t_ref[...], enc_t, preferred_element_type=jnp.float32)  # (L, S*B)
    b_t = jnp.dot(w2t_ref[...], enc_t, preferred_element_type=jnp.float32)  # (L, S*B)
    logits = (jnp.dot(a_t, e1_ref[...], preferred_element_type=jnp.float32)
              + jnp.dot(b_t, e2_ref[...], preferred_element_type=jnp.float32)
              + bl_ref[...])                                                # (L, 128)

    # ---- softmax over L (sublane axis): unrolled max/adds + EUP reciprocal ----
    m = logits[0:1, :]
    for l in range(1, L):
        m = jnp.maximum(m, logits[l:l + 1, :])
    e = jnp.exp(logits - m)                        # one padded vreg -> one EUP pass
    ssum = e[0:1, :]
    for l in range(1, L):
        ssum = ssum + e[l:l + 1, :]
    out_ref[...] = e * pl.reciprocal(ssum, approx=False)   # single lane-dense store


def fused_forward_pallas(x_tb, wih_cat, whh_blk, b_cat, w1t, w2t, bl_t, e1, e2):
    n_in = 9
    return pl.pallas_call(
        fused_kernel,
        out_shape=jax.ShapeDtypeStruct((L, B * S * S), jnp.float32),
        in_specs=[pl.BlockSpec(memory_space=pltpu.MemorySpace.VMEM)
                  for _ in range(n_in)],
        out_specs=pl.BlockSpec(memory_space=pltpu.MemorySpace.VMEM),
    )(x_tb, wih_cat, whh_blk, b_cat, w1t, w2t, bl_t, e1, e2)


# ------------------------------------------------------------------
# Full forward (is_training=False path -> span probabilities)
# ------------------------------------------------------------------
def _make_expanders():
    """0/1 matrices mapping per-position columns (p = t*B + b) to output
    lanes q = b*S*S + i*S + j:  E1 selects position i, E2 selects j."""
    q = np.arange(B * S * S)
    b_idx = q // (S * S)
    i_idx = (q // S) % S
    j_idx = q % S
    e1 = np.zeros((S * B, B * S * S), np.float32)
    e2 = np.zeros((S * B, B * S * S), np.float32)
    e1[i_idx * B + b_idx, q] = 1.0
    e2[j_idx * B + b_idx, q] = 1.0
    return e1, e2


def my_model_forward(input_ids, input_mask, input_seg, params):
    del input_mask  # TODO(synk): mask is consumed inside real BERT attention only.
    enc0 = (params["word_emb"][input_ids]
            + params["seg_emb"][input_seg]
            + params["pos_emb"][None, :, :]).astype(jnp.float32)   # (B, S, H)

    # time-major rows (p = t*B + b) -> per-step kernel slice is contiguous
    x_tb = jnp.transpose(enc0, (1, 0, 2)).reshape(S * B, H)

    def prescale_g(w):   # scale the g-gate column block by 2 (tanh-via-sigmoid)
        return jnp.concatenate(
            [w[..., :2 * H], 2.0 * w[..., 2 * H:3 * H], w[..., 3 * H:]], axis=-1)

    wih_f = prescale_g(params["wih_f"])
    wih_b = prescale_g(params["wih_b"])
    whh_f = prescale_g(params["whh_f"])
    whh_b = prescale_g(params["whh_b"])
    b_f = prescale_g(params["b_f"])
    b_b = prescale_g(params["b_b"])

    wih_cat = jnp.concatenate([wih_f, wih_b], axis=1)                  # (H, 8H)
    b_cat = jnp.concatenate([b_f, b_b], axis=1)                        # (1, 8H)
    z = jnp.zeros_like(whh_f)
    whh_blk = jnp.concatenate(
        [jnp.concatenate([whh_f, z], axis=1),
         jnp.concatenate([z, whh_b], axis=1)], axis=0)                 # (2H, 8H)

    W = params["w_logits"]                                             # (L, 4H)
    w1t = W[:, :2 * H]                                                 # (L, 2H)
    w2t = W[:, 2 * H:]                                                 # (L, 2H)
    bl_t = jnp.transpose(params["b_logits"])                           # (L, 1)

    e1_np, e2_np = _make_expanders()
    out = fused_forward_pallas(x_tb, wih_cat, whh_blk, b_cat, w1t, w2t, bl_t,
                               jnp.asarray(e1_np), jnp.asarray(e2_np))  # (L, B*S*S)
    # layout plumbing back to (B, S, S, L) happens in XLA, not in the kernel
    return jnp.transpose(out.reshape(L, B, S, S), (1, 2, 3, 0))


# ------------------------------------------------------------------
# Pure-JAX reference (correctness sanity check)
# ------------------------------------------------------------------
def _lstm_ref(x, wih, whh, b, reverse):
    Sx = x.shape[0]
    h = jnp.zeros((H,), jnp.float32)
    c = jnp.zeros((H,), jnp.float32)
    out = [None] * Sx
    order = range(Sx - 1, -1, -1) if reverse else range(Sx)
    for t in order:
        g = x[t] @ wih + b[0] + h @ whh
        i_g = jax.nn.sigmoid(g[0:H])
        f_g = jax.nn.sigmoid(g[H:2 * H])
        g_g = jnp.tanh(g[2 * H:3 * H])
        o_g = jax.nn.sigmoid(g[3 * H:4 * H])
        c = f_g * c + i_g * g_g
        h = o_g * jnp.tanh(c)
        out[t] = h
    return jnp.stack(out, axis=0)


def ref_forward(input_ids, input_seg, params):
    enc0 = (params["word_emb"][input_ids]
            + params["seg_emb"][input_seg]
            + params["pos_emb"][None, :, :])
    outs = []
    for b in range(enc0.shape[0]):
        f = _lstm_ref(enc0[b], params["wih_f"], params["whh_f"], params["b_f"], False)
        r = _lstm_ref(enc0[b], params["wih_b"], params["whh_b"], params["b_b"], True)
        outs.append(jnp.concatenate([f, r], axis=-1))
    enc = jnp.stack(outs, axis=0)                            # (B, S, 2H)
    start = jnp.broadcast_to(enc[:, :, None, :], (B, S, S, 2 * H))
    end = jnp.transpose(start, (0, 2, 1, 3))
    span = jnp.concatenate([start, end], axis=-1)            # (B, S, S, 4H)
    logits = span @ params["w_logits"].T + params["b_logits"][0]
    return jax.nn.softmax(logits, axis=-1)


def init_params(key):
    ks = jax.random.split(key, 12)
    s_emb, s_rnn, s_lin = 0.02, 1.0 / np.sqrt(H), 1.0 / np.sqrt(4 * H)
    return {
        "word_emb": s_emb * jax.random.normal(ks[0], (VOCAB, H), jnp.float32),
        "seg_emb":  s_emb * jax.random.normal(ks[1], (2, H), jnp.float32),
        "pos_emb":  s_emb * jax.random.normal(ks[2], (S, H), jnp.float32),
        "wih_f": s_rnn * jax.random.normal(ks[3], (H, 4 * H), jnp.float32),
        "whh_f": s_rnn * jax.random.normal(ks[4], (H, 4 * H), jnp.float32),
        "b_f":   s_rnn * jax.random.normal(ks[5], (1, 4 * H), jnp.float32),
        "wih_b": s_rnn * jax.random.normal(ks[6], (H, 4 * H), jnp.float32),
        "whh_b": s_rnn * jax.random.normal(ks[7], (H, 4 * H), jnp.float32),
        "b_b":   s_rnn * jax.random.normal(ks[8], (1, 4 * H), jnp.float32),
        "w_logits": s_lin * jax.random.normal(ks[9], (L, 4 * H), jnp.float32),
        "b_logits": s_lin * jax.random.normal(ks[10], (1, L), jnp.float32),
    }


if __name__ == "__main__":
    key = jax.random.PRNGKey(0)
    k_in, k_par = jax.random.split(key)
    params = init_params(k_par)

    input_ids = jax.random.randint(k_in, (B, S), 0, VOCAB, dtype=jnp.int32)
    input_mask = jnp.ones((B, S), jnp.int32)
    input_seg = jnp.zeros((B, S), jnp.int32)

    forward = jax.jit(my_model_forward)
    span_prob = jax.block_until_ready(
        forward(input_ids, input_mask, input_seg, params))

    ref = jax.block_until_ready(ref_forward(input_ids, input_seg, params))
    np.testing.assert_allclose(np.asarray(span_prob), np.asarray(ref),
                               rtol=1e-3, atol=1e-3)
    print("KERNEL_OK")
</pallas_src>

<mosaic_0001>
module attributes {stable_mosaic.version = 11 : i64} {
  func.func @fused_kernel(%arg0: memref<16x32xf32, #tpu.memory_space<vmem>>, %arg1: memref<32x256xf32, #tpu.memory_space<vmem>>, %arg2: memref<64x256xf32, #tpu.memory_space<vmem>>, %arg3: memref<1x256xf32, #tpu.memory_space<vmem>>, %arg4: memref<5x64xf32, #tpu.memory_space<vmem>>, %arg5: memref<5x64xf32, #tpu.memory_space<vmem>>, %arg6: memref<5x1xf32, #tpu.memory_space<vmem>>, %arg7: memref<16x128xf32, #tpu.memory_space<vmem>>, %arg8: memref<16x128xf32, #tpu.memory_space<vmem>>, %arg9: memref<5x128xf32, #tpu.memory_space<vmem>>) attributes {dimension_semantics = [], scalar_prefetch = 0 : i64, scratch_operands = 0 : i64, tpu.core_type = #tpu.core_type<tc>} {
    %c0 = arith.constant 0 : index
    %c0_0 = arith.constant 0 : index
    %0 = vector.load %arg0[%c0, %c0_0] : memref<16x32xf32, #tpu.memory_space<vmem>>, vector<16x32xf32>
    %c0_1 = arith.constant 0 : index
    %c0_2 = arith.constant 0 : index
    %1 = vector.load %arg1[%c0_1, %c0_2] : memref<32x256xf32, #tpu.memory_space<vmem>>, vector<32x256xf32>
    %cst = arith.constant dense<0.000000e+00> : vector<16x256xf32>
    %2 = tpu.matmul %0, %1, %cst {dimension_numbers = #tpu.dot_dimension_numbers<[1], [0], [0], [1], [0, 0, 1, 1], [], []>} : vector<16x32xf32>, vector<32x256xf32>, vector<16x256xf32> -> vector<16x256xf32>
    %c0_3 = arith.constant 0 : index
    %c0_4 = arith.constant 0 : index
    %3 = vector.load %arg3[%c0_3, %c0_4] : memref<1x256xf32, #tpu.memory_space<vmem>>, vector<1x256xf32>
    %4 = vector.broadcast %3 : vector<1x256xf32> to vector<16x256xf32>
    %5 = arith.addf %2, %4 : vector<16x256xf32>
    %c0_5 = arith.constant 0 : index
    %c0_6 = arith.constant 0 : index
    %6 = vector.load %arg2[%c0_5, %c0_6] : memref<64x256xf32, #tpu.memory_space<vmem>>, vector<64x256xf32>
    %cst_7 = arith.constant 0.000000e+00 : f32
    %7 = vector.broadcast %cst_7 : f32 to vector<2x32xf32>
    %cst_8 = arith.constant 0.000000e+00 : f32
    %8 = vector.broadcast %cst_8 : f32 to vector<2x32xf32>
    %cst_9 = arith.constant 0.000000e+00 : f32
    %9 = vector.broadcast %cst_9 : f32 to vector<2x32xf32>
    %cst_10 = arith.constant 0.000000e+00 : f32
    %10 = vector.broadcast %cst_10 : f32 to vector<2x32xf32>
    %11 = tpu.concatenate %7, %9 in 1 : vector<2x32xf32>, vector<2x32xf32> -> vector<2x64xf32>
    %cst_11 = arith.constant dense<0.000000e+00> : vector<2x256xf32>
    %12 = tpu.matmul %11, %6, %cst_11 {dimension_numbers = #tpu.dot_dimension_numbers<[1], [0], [0], [1], [0, 0, 1, 1], [], []>} : vector<2x64xf32>, vector<64x256xf32>, vector<2x256xf32> -> vector<2x256xf32>
    %13 = vector.extract_strided_slice %5 {offsets = [0, 0], sizes = [2, 128], strides = [1, 1]} : vector<16x256xf32> to vector<2x128xf32>
    %14 = vector.extract_strided_slice %12 {offsets = [0, 0], sizes = [2, 128], strides = [1, 1]} : vector<2x256xf32> to vector<2x128xf32>
    %15 = arith.addf %13, %14 : vector<2x128xf32>
    %16 = vector.extract_strided_slice %5 {offsets = [14, 128], sizes = [2, 128], strides = [1, 1]} : vector<16x256xf32> to vector<2x128xf32>
    %17 = vector.extract_strided_slice %12 {offsets = [0, 128], sizes = [2, 128], strides = [1, 1]} : vector<2x256xf32> to vector<2x128xf32>
    %18 = arith.addf %16, %17 : vector<2x128xf32>
    %19 = arith.negf %15 : vector<2x128xf32>
    %20 = math.exp %19 : vector<2x128xf32>
    %cst_12 = arith.constant 1.000000e+00 : f32
    %21 = vector.broadcast %cst_12 : f32 to vector<2x128xf32>
    %22 = arith.addf %21, %20 : vector<2x128xf32>
    %23 = arith.divf %21, %22 : vector<2x128xf32>
    %24 = arith.negf %18 : vector<2x128xf32>
    %25 = math.exp %24 : vector<2x128xf32>
    %cst_13 = arith.constant 1.000000e+00 : f32
    %26 = vector.broadcast %cst_13 : f32 to vector<2x128xf32>
    %27 = arith.addf %26, %25 : vector<2x128xf32>
    %28 = arith.divf %26, %27 : vector<2x128xf32>
    %29 = vector.extract_strided_slice %23 {offsets = [0, 32], sizes = [2, 32], strides = [1, 1]} : vector<2x128xf32> to vector<2x32xf32>
    %30 = arith.mulf %29, %8 : vector<2x32xf32>
    %31 = vector.extract_strided_slice %23 {offsets = [0, 0], sizes = [2, 32], strides = [1, 1]} : vector<2x128xf32> to vector<2x32xf32>
    %32 = vector.extract_strided_slice %23 {offsets = [0, 64], sizes = [2, 32], strides = [1, 1]} : vector<2x128xf32> to vector<2x32xf32>
    %cst_14 = arith.constant 2.000000e+00 : f32
    %33 = vector.broadcast %cst_14 : f32 to vector<2x32xf32>
    %34 = arith.mulf %33, %32 : vector<2x32xf32>
    %cst_15 = arith.constant 1.000000e+00 : f32
    %35 = vector.broadcast %cst_15 : f32 to vector<2x32xf32>
    %36 = arith.subf %34, %35 : vector<2x32xf32>
    %37 = arith.mulf %31, %36 : vector<2x32xf32>
    %38 = arith.addf %30, %37 : vector<2x32xf32>
    %39 = vector.extract_strided_slice %28 {offsets = [0, 32], sizes = [2, 32], strides = [1, 1]} : vector<2x128xf32> to vector<2x32xf32>
    %40 = arith.mulf %39, %10 : vector<2x32xf32>
    %41 = vector.extract_strided_slice %28 {offsets = [0, 0], sizes = [2, 32], strides = [1, 1]} : vector<2x128xf32> to vector<2x32xf32>
    %42 = vector.extract_strided_slice %28 {offsets = [0, 64], sizes = [2, 32], strides = [1, 1]} : vector<2x128xf32> to vector<2x32xf32>
    %cst_16 = arith.constant 2.000000e+00 : f32
    %43 = vector.broadcast %cst_16 : f32 to vector<2x32xf32>
    %44 = arith.mulf %43, %42 : vector<2x32xf32>
    %cst_17 = arith.constant 1.000000e+00 : f32
    %45 = vector.broadcast %cst_17 : f32 to vector<2x32xf32>
    %46 = arith.subf %44, %45 : vector<2x32xf32>
    %47 = arith.mulf %41, %46 : vector<2x32xf32>
    %48 = arith.addf %40, %47 : vector<2x32xf32>
    %49 = tpu.concatenate %38, %48 in 1 : vector<2x32xf32>, vector<2x32xf32> -> vector<2x64xf32>
    %50 = math.tanh %49 : vector<2x64xf32>
    %51 = vector.extract_strided_slice %23 {offsets = [0, 96], sizes = [2, 32], strides = [1, 1]} : vector<2x128xf32> to vector<2x32xf32>
    %52 = vector.extract_strided_slice %50 {offsets = [0, 0], sizes = [2, 32], strides = [1, 1]} : vector<2x64xf32> to vector<2x32xf32>
    %53 = arith.mulf %51, %52 : vector<2x32xf32>
    %54 = vector.extract_strided_slice %28 {offsets = [0, 96], sizes = [2, 32], strides = [1, 1]} : vector<2x128xf32> to vector<2x32xf32>
    %55 = vector.extract_strided_slice %50 {offsets = [0, 32], sizes = [2, 32], strides = [1, 1]} : vector<2x64xf32> to vector<2x32xf32>
    %56 = arith.mulf %54, %55 : vector<2x32xf32>
    %57 = tpu.concatenate %53, %56 in 1 : vector<2x32xf32>, vector<2x32xf32> -> vector<2x64xf32>
    %cst_18 = arith.constant dense<0.000000e+00> : vector<2x256xf32>
    %58 = tpu.matmul %57, %6, %cst_18 {dimension_numbers = #tpu.dot_dimension_numbers<[1], [0], [0], [1], [0, 0, 1, 1], [], []>} : vector<2x64xf32>, vector<64x256xf32>, vector<2x256xf32> -> vector<2x256xf32>
    %59 = vector.extract_strided_slice %5 {offsets = [2, 0], sizes = [2, 128], strides = [1, 1]} : vector<16x256xf32> to vector<2x128xf32>
    %60 = vector.extract_strided_slice %58 {offsets = [0, 0], sizes = [2, 128], strides = [1, 1]} : vector<2x256xf32> to vector<2x128xf32>
    %61 = arith.addf %59, %60 : vector<2x128xf32>
    %62 = vector.extract_strided_slice %5 {offsets = [12, 128], sizes = [2, 128], strides = [1, 1]} : vector<16x256xf32> to vector<2x128xf32>
    %63 = vector.extract_strided_slice %58 {offsets = [0, 128], sizes = [2, 128], strides = [1, 1]} : vector<2x256xf32> to vector<2x128xf32>
    %64 = arith.addf %62, %63 : vector<2x128xf32>
    %65 = arith.negf %61 : vector<2x128xf32>
    %66 = math.exp %65 : vector<2x128xf32>
    %cst_19 = arith.constant 1.000000e+00 : f32
    %67 = vector.broadcast %cst_19 : f32 to vector<2x128xf32>
    %68 = arith.addf %67, %66 : vector<2x128xf32>
    %69 = arith.divf %67, %68 : vector<2x128xf32>
    %70 = arith.negf %64 : vector<2x128xf32>
    %71 = math.exp %70 : vector<2x128xf32>
    %cst_20 = arith.constant 1.000000e+00 : f32
    %72 = vector.broadcast %cst_20 : f32 to vector<2x128xf32>
    %73 = arith.addf %72, %71 : vector<2x128xf32>
    %74 = arith.divf %72, %73 : vector<2x128xf32>
    %75 = vector.extract_strided_slice %69 {offsets = [0, 32], sizes = [2, 32], strides = [1, 1]} : vector<2x128xf32> to vector<2x32xf32>
    %76 = arith.mulf %75, %38 : vector<2x32xf32>
    %77 = vector.extract_strided_slice %69 {offsets = [0, 0], sizes = [2, 32], strides = [1, 1]} : vector<2x128xf32> to vector<2x32xf32>
    %78 = vector.extract_strided_slice %69 {offsets = [0, 64], sizes = [2, 32], strides = [1, 1]} : vector<2x128xf32> to vector<2x32xf32>
    %cst_21 = arith.constant 2.000000e+00 : f32
    %79 = vector.broadcast %cst_21 : f32 to vector<2x32xf32>
    %80 = arith.mulf %79, %78 : vector<2x32xf32>
    %cst_22 = arith.constant 1.000000e+00 : f32
    %81 = vector.broadcast %cst_22 : f32 to vector<2x32xf32>
    %82 = arith.subf %80, %81 : vector<2x32xf32>
    %83 = arith.mulf %77, %82 : vector<2x32xf32>
    %84 = arith.addf %76, %83 : vector<2x32xf32>
    %85 = vector.extract_strided_slice %74 {offsets = [0, 32], sizes = [2, 32], strides = [1, 1]} : vector<2x128xf32> to vector<2x32xf32>
    %86 = arith.mulf %85, %48 : vector<2x32xf32>
    %87 = vector.extract_strided_slice %74 {offsets = [0, 0], sizes = [2, 32], strides = [1, 1]} : vector<2x128xf32> to vector<2x32xf32>
    %88 = vector.extract_strided_slice %74 {offsets = [0, 64], sizes = [2, 32], strides = [1, 1]} : vector<2x128xf32> to vector<2x32xf32>
    %cst_23 = arith.constant 2.000000e+00 : f32
    %89 = vector.broadcast %cst_23 : f32 to vector<2x32xf32>
    %90 = arith.mulf %89, %88 : vector<2x32xf32>
    %cst_24 = arith.constant 1.000000e+00 : f32
    %91 = vector.broadcast %cst_24 : f32 to vector<2x32xf32>
    %92 = arith.subf %90, %91 : vector<2x32xf32>
    %93 = arith.mulf %87, %92 : vector<2x32xf32>
    %94 = arith.addf %86, %93 : vector<2x32xf32>
    %95 = tpu.concatenate %84, %94 in 1 : vector<2x32xf32>, vector<2x32xf32> -> vector<2x64xf32>
    %96 = math.tanh %95 : vector<2x64xf32>
    %97 = vector.extract_strided_slice %69 {offsets = [0, 96], sizes = [2, 32], strides = [1, 1]} : vector<2x128xf32> to vector<2x32xf32>
    %98 = vector.extract_strided_slice %96 {offsets = [0, 0], sizes = [2, 32], strides = [1, 1]} : vector<2x64xf32> to vector<2x32xf32>
    %99 = arith.mulf %97, %98 : vector<2x32xf32>
    %100 = vector.extract_strided_slice %74 {offsets = [0, 96], sizes = [2, 32], strides = [1, 1]} : vector<2x128xf32> to vector<2x32xf32>
    %101 = vector.extract_strided_slice %96 {offsets = [0, 32], sizes = [2, 32], strides = [1, 1]} : vector<2x64xf32> to vector<2x32xf32>
    %102 = arith.mulf %100, %101 : vector<2x32xf32>
    %103 = tpu.concatenate %99, %102 in 1 : vector<2x32xf32>, vector<2x32xf32> -> vector<2x64xf32>
    %cst_25 = arith.constant dense<0.000000e+00> : vector<2x256xf32>
    %104 = tpu.matmul %103, %6, %cst_25 {dimension_numbers = #tpu.dot_dimension_numbers<[1], [0], [0], [1], [0, 0, 1, 1], [], []>} : vector<2x64xf32>, vector<64x256xf32>, vector<2x256xf32> -> vector<2x256xf32>
    %105 = vector.extract_strided_slice %5 {offsets = [4, 0], sizes = [2, 128], strides = [1, 1]} : vector<16x256xf32> to vector<2x128xf32>
    %106 = vector.extract_strided_slice %104 {offsets = [0, 0], sizes = [2, 128], strides = [1, 1]} : vector<2x256xf32> to vector<2x128xf32>
    %107 = arith.addf %105, %106 : vector<2x128xf32>
    %108 = vector.extract_strided_slice %5 {offsets = [10, 128], sizes = [2, 128], strides = [1, 1]} : vector<16x256xf32> to vector<2x128xf32>
    %109 = vector.extract_strided_slice %104 {offsets = [0, 128], sizes = [2, 128], strides = [1, 1]} : vector<2x256xf32> to vector<2x128xf32>
    %110 = arith.addf %108, %109 : vector<2x128xf32>
    %111 = arith.negf %107 : vector<2x128xf32>
    %112 = math.exp %111 : vector<2x128xf32>
    %cst_26 = arith.constant 1.000000e+00 : f32
    %113 = vector.broadcast %cst_26 : f32 to vector<2x128xf32>
    %114 = arith.addf %113, %112 : vector<2x128xf32>
    %115 = arith.divf %113, %114 : vector<2x128xf32>
    %116 = arith.negf %110 : vector<2x128xf32>
    %117 = math.exp %116 : vector<2x128xf32>
    %cst_27 = arith.constant 1.000000e+00 : f32
    %118 = vector.broadcast %cst_27 : f32 to vector<2x128xf32>
    %119 = arith.addf %118, %117 : vector<2x128xf32>
    %120 = arith.divf %118, %119 : vector<2x128xf32>
    %121 = vector.extract_strided_slice %115 {offsets = [0, 32], sizes = [2, 32], strides = [1, 1]} : vector<2x128xf32> to vector<2x32xf32>
    %122 = arith.mulf %121, %84 : vector<2x32xf32>
    %123 = vector.extract_strided_slice %115 {offsets = [0, 0], sizes = [2, 32], strides = [1, 1]} : vector<2x128xf32> to vector<2x32xf32>
    %124 = vector.extract_strided_slice %115 {offsets = [0, 64], sizes = [2, 32], strides = [1, 1]} : vector<2x128xf32> to vector<2x32xf32>
    %cst_28 = arith.constant 2.000000e+00 : f32
    %125 = vector.broadcast %cst_28 : f32 to vector<2x32xf32>
    %126 = arith.mulf %125, %124 : vector<2x32xf32>
    %cst_29 = arith.constant 1.000000e+00 : f32
    %127 = vector.broadcast %cst_29 : f32 to vector<2x32xf32>
    %128 = arith.subf %126, %127 : vector<2x32xf32>
    %129 = arith.mulf %123, %128 : vector<2x32xf32>
    %130 = arith.addf %122, %129 : vector<2x32xf32>
    %131 = vector.extract_strided_slice %120 {offsets = [0, 32], sizes = [2, 32], strides = [1, 1]} : vector<2x128xf32> to vector<2x32xf32>
    %132 = arith.mulf %131, %94 : vector<2x32xf32>
    %133 = vector.extract_strided_slice %120 {offsets = [0, 0], sizes = [2, 32], strides = [1, 1]} : vector<2x128xf32> to vector<2x32xf32>
    %134 = vector.extract_strided_slice %120 {offsets = [0, 64], sizes = [2, 32], strides = [1, 1]} : vector<2x128xf32> to vector<2x32xf32>
    %cst_30 = arith.constant 2.000000e+00 : f32
    %135 = vector.broadcast %cst_30 : f32 to vector<2x32xf32>
    %136 = arith.mulf %135, %134 : vector<2x32xf32>
    %cst_31 = arith.constant 1.000000e+00 : f32
    %137 = vector.broadcast %cst_31 : f32 to vector<2x32xf32>
    %138 = arith.subf %136, %137 : vector<2x32xf32>
    %139 = arith.mulf %133, %138 : vector<2x32xf32>
    %140 = arith.addf %132, %139 : vector<2x32xf32>
    %141 = tpu.concatenate %130, %140 in 1 : vector<2x32xf32>, vector<2x32xf32> -> vector<2x64xf32>
    %142 = math.tanh %141 : vector<2x64xf32>
    %143 = vector.extract_strided_slice %115 {offsets = [0, 96], sizes = [2, 32], strides = [1, 1]} : vector<2x128xf32> to vector<2x32xf32>
    %144 = vector.extract_strided_slice %142 {offsets = [0, 0], sizes = [2, 32], strides = [1, 1]} : vector<2x64xf32> to vector<2x32xf32>
    %145 = arith.mulf %143, %144 : vector<2x32xf32>
    %146 = vector.extract_strided_slice %120 {offsets = [0, 96], sizes = [2, 32], strides = [1, 1]} : vector<2x128xf32> to vector<2x32xf32>
    %147 = vector.extract_strided_slice %142 {offsets = [0, 32], sizes = [2, 32], strides = [1, 1]} : vector<2x64xf32> to vector<2x32xf32>
    %148 = arith.mulf %146, %147 : vector<2x32xf32>
    %149 = tpu.concatenate %145, %148 in 1 : vector<2x32xf32>, vector<2x32xf32> -> vector<2x64xf32>
    %cst_32 = arith.constant dense<0.000000e+00> : vector<2x256xf32>
    %150 = tpu.matmul %149, %6, %cst_32 {dimension_numbers = #tpu.dot_dimension_numbers<[1], [0], [0], [1], [0, 0, 1, 1], [], []>} : vector<2x64xf32>, vector<64x256xf32>, vector<2x256xf32> -> vector<2x256xf32>
    %151 = vector.extract_strided_slice %5 {offsets = [6, 0], sizes = [2, 128], strides = [1, 1]} : vector<16x256xf32> to vector<2x128xf32>
    %152 = vector.extract_strided_slice %150 {offsets = [0, 0], sizes = [2, 128], strides = [1, 1]} : vector<2x256xf32> to vector<2x128xf32>
    %153 = arith.addf %151, %152 : vector<2x128xf32>
    %154 = vector.extract_strided_slice %5 {offsets = [8, 128], sizes = [2, 128], strides = [1, 1]} : vector<16x256xf32> to vector<2x128xf32>
    %155 = vector.extract_strided_slice %150 {offsets = [0, 128], sizes = [2, 128], strides = [1, 1]} : vector<2x256xf32> to vector<2x128xf32>
    %156 = arith.addf %154, %155 : vector<2x128xf32>
    %157 = arith.negf %153 : vector<2x128xf32>
    %158 = math.exp %157 : vector<2x128xf32>
    %cst_33 = arith.constant 1.000000e+00 : f32
    %159 = vector.broadcast %cst_33 : f32 to vector<2x128xf32>
    %160 = arith.addf %159, %158 : vector<2x128xf32>
    %161 = arith.divf %159, %160 : vector<2x128xf32>
    %162 = arith.negf %156 : vector<2x128xf32>
    %163 = math.exp %162 : vector<2x128xf32>
    %cst_34 = arith.constant 1.000000e+00 : f32
    %164 = vector.broadcast %cst_34 : f32 to vector<2x128xf32>
    %165 = arith.addf %164, %163 : vector<2x128xf32>
    %166 = arith.divf %164, %165 : vector<2x128xf32>
    %167 = vector.extract_strided_slice %161 {offsets = [0, 32], sizes = [2, 32], strides = [1, 1]} : vector<2x128xf32> to vector<2x32xf32>
    %168 = arith.mulf %167, %130 : vector<2x32xf32>
    %169 = vector.extract_strided_slice %161 {offsets = [0, 0], sizes = [2, 32], strides = [1, 1]} : vector<2x128xf32> to vector<2x32xf32>
    %170 = vector.extract_strided_slice %161 {offsets = [0, 64], sizes = [2, 32], strides = [1, 1]} : vector<2x128xf32> to vector<2x32xf32>
    %cst_35 = arith.constant 2.000000e+00 : f32
    %171 = vector.broadcast %cst_35 : f32 to vector<2x32xf32>
    %172 = arith.mulf %171, %170 : vector<2x32xf32>
    %cst_36 = arith.constant 1.000000e+00 : f32
    %173 = vector.broadcast %cst_36 : f32 to vector<2x32xf32>
    %174 = arith.subf %172, %173 : vector<2x32xf32>
    %175 = arith.mulf %169, %174 : vector<2x32xf32>
    %176 = arith.addf %168, %175 : vector<2x32xf32>
    %177 = vector.extract_strided_slice %166 {offsets = [0, 32], sizes = [2, 32], strides = [1, 1]} : vector<2x128xf32> to vector<2x32xf32>
    %178 = arith.mulf %177, %140 : vector<2x32xf32>
    %179 = vector.extract_strided_slice %166 {offsets = [0, 0], sizes = [2, 32], strides = [1, 1]} : vector<2x128xf32> to vector<2x32xf32>
    %180 = vector.extract_strided_slice %166 {offsets = [0, 64], sizes = [2, 32], strides = [1, 1]} : vector<2x128xf32> to vector<2x32xf32>
    %cst_37 = arith.constant 2.000000e+00 : f32
    %181 = vector.broadcast %cst_37 : f32 to vector<2x32xf32>
    %182 = arith.mulf %181, %180 : vector<2x32xf32>
    %cst_38 = arith.constant 1.000000e+00 : f32
    %183 = vector.broadcast %cst_38 : f32 to vector<2x32xf32>
    %184 = arith.subf %182, %183 : vector<2x32xf32>
    %185 = arith.mulf %179, %184 : vector<2x32xf32>
    %186 = arith.addf %178, %185 : vector<2x32xf32>
    %187 = tpu.concatenate %176, %186 in 1 : vector<2x32xf32>, vector<2x32xf32> -> vector<2x64xf32>
    %188 = math.tanh %187 : vector<2x64xf32>
    %189 = vector.extract_strided_slice %161 {offsets = [0, 96], sizes = [2, 32], strides = [1, 1]} : vector<2x128xf32> to vector<2x32xf32>
    %190 = vector.extract_strided_slice %188 {offsets = [0, 0], sizes = [2, 32], strides = [1, 1]} : vector<2x64xf32> to vector<2x32xf32>
    %191 = arith.mulf %189, %190 : vector<2x32xf32>
    %192 = vector.extract_strided_slice %166 {offsets = [0, 96], sizes = [2, 32], strides = [1, 1]} : vector<2x128xf32> to vector<2x32xf32>
    %193 = vector.extract_strided_slice %188 {offsets = [0, 32], sizes = [2, 32], strides = [1, 1]} : vector<2x64xf32> to vector<2x32xf32>
    %194 = arith.mulf %192, %193 : vector<2x32xf32>
    %195 = tpu.concatenate %191, %194 in 1 : vector<2x32xf32>, vector<2x32xf32> -> vector<2x64xf32>
    %cst_39 = arith.constant dense<0.000000e+00> : vector<2x256xf32>
    %196 = tpu.matmul %195, %6, %cst_39 {dimension_numbers = #tpu.dot_dimension_numbers<[1], [0], [0], [1], [0, 0, 1, 1], [], []>} : vector<2x64xf32>, vector<64x256xf32>, vector<2x256xf32> -> vector<2x256xf32>
    %197 = vector.extract_strided_slice %5 {offsets = [8, 0], sizes = [2, 128], strides = [1, 1]} : vector<16x256xf32> to vector<2x128xf32>
    %198 = vector.extract_strided_slice %196 {offsets = [0, 0], sizes = [2, 128], strides = [1, 1]} : vector<2x256xf32> to vector<2x128xf32>
    %199 = arith.addf %197, %198 : vector<2x128xf32>
    %200 = vector.extract_strided_slice %5 {offsets = [6, 128], sizes = [2, 128], strides = [1, 1]} : vector<16x256xf32> to vector<2x128xf32>
    %201 = vector.extract_strided_slice %196 {offsets = [0, 128], sizes = [2, 128], strides = [1, 1]} : vector<2x256xf32> to vector<2x128xf32>
    %202 = arith.addf %200, %201 : vector<2x128xf32>
    %203 = arith.negf %199 : vector<2x128xf32>
    %204 = math.exp %203 : vector<2x128xf32>
    %cst_40 = arith.constant 1.000000e+00 : f32
    %205 = vector.broadcast %cst_40 : f32 to vector<2x128xf32>
    %206 = arith.addf %205, %204 : vector<2x128xf32>
    %207 = arith.divf %205, %206 : vector<2x128xf32>
    %208 = arith.negf %202 : vector<2x128xf32>
    %209 = math.exp %208 : vector<2x128xf32>
    %cst_41 = arith.constant 1.000000e+00 : f32
    %210 = vector.broadcast %cst_41 : f32 to vector<2x128xf32>
    %211 = arith.addf %210, %209 : vector<2x128xf32>
    %212 = arith.divf %210, %211 : vector<2x128xf32>
    %213 = vector.extract_strided_slice %207 {offsets = [0, 32], sizes = [2, 32], strides = [1, 1]} : vector<2x128xf32> to vector<2x32xf32>
    %214 = arith.mulf %213, %176 : vector<2x32xf32>
    %215 = vector.extract_strided_slice %207 {offsets = [0, 0], sizes = [2, 32], strides = [1, 1]} : vector<2x128xf32> to vector<2x32xf32>
    %216 = vector.extract_strided_slice %207 {offsets = [0, 64], sizes = [2, 32], strides = [1, 1]} : vector<2x128xf32> to vector<2x32xf32>
    %cst_42 = arith.constant 2.000000e+00 : f32
    %217 = vector.broadcast %cst_42 : f32 to vector<2x32xf32>
    %218 = arith.mulf %217, %216 : vector<2x32xf32>
    %cst_43 = arith.constant 1.000000e+00 : f32
    %219 = vector.broadcast %cst_43 : f32 to vector<2x32xf32>
    %220 = arith.subf %218, %219 : vector<2x32xf32>
    %221 = arith.mulf %215, %220 : vector<2x32xf32>
    %222 = arith.addf %214, %221 : vector<2x32xf32>
    %223 = vector.extract_strided_slice %212 {offsets = [0, 32], sizes = [2, 32], strides = [1, 1]} : vector<2x128xf32> to vector<2x32xf32>
    %224 = arith.mulf %223, %186 : vector<2x32xf32>
    %225 = vector.extract_strided_slice %212 {offsets = [0, 0], sizes = [2, 32], strides = [1, 1]} : vector<2x128xf32> to vector<2x32xf32>
    %226 = vector.extract_strided_slice %212 {offsets = [0, 64], sizes = [2, 32], strides = [1, 1]} : vector<2x128xf32> to vector<2x32xf32>
    %cst_44 = arith.constant 2.000000e+00 : f32
    %227 = vector.broadcast %cst_44 : f32 to vector<2x32xf32>
    %228 = arith.mulf %227, %226 : vector<2x32xf32>
    %cst_45 = arith.constant 1.000000e+00 : f32
    %229 = vector.broadcast %cst_45 : f32 to vector<2x32xf32>
    %230 = arith.subf %228, %229 : vector<2x32xf32>
    %231 = arith.mulf %225, %230 : vector<2x32xf32>
    %232 = arith.addf %224, %231 : vector<2x32xf32>
    %233 = tpu.concatenate %222, %232 in 1 : vector<2x32xf32>, vector<2x32xf32> -> vector<2x64xf32>
    %234 = math.tanh %233 : vector<2x64xf32>
    %235 = vector.extract_strided_slice %207 {offsets = [0, 96], sizes = [2, 32], strides = [1, 1]} : vector<2x128xf32> to vector<2x32xf32>
    %236 = vector.extract_strided_slice %234 {offsets = [0, 0], sizes = [2, 32], strides = [1, 1]} : vector<2x64xf32> to vector<2x32xf32>
    %237 = arith.mulf %235, %236 : vector<2x32xf32>
    %238 = vector.extract_strided_slice %212 {offsets = [0, 96], sizes = [2, 32], strides = [1, 1]} : vector<2x128xf32> to vector<2x32xf32>
    %239 = vector.extract_strided_slice %234 {offsets = [0, 32], sizes = [2, 32], strides = [1, 1]} : vector<2x64xf32> to vector<2x32xf32>
    %240 = arith.mulf %238, %239 : vector<2x32xf32>
    %241 = tpu.concatenate %237, %240 in 1 : vector<2x32xf32>, vector<2x32xf32> -> vector<2x64xf32>
    %cst_46 = arith.constant dense<0.000000e+00> : vector<2x256xf32>
    %242 = tpu.matmul %241, %6, %cst_46 {dimension_numbers = #tpu.dot_dimension_numbers<[1], [0], [0], [1], [0, 0, 1, 1], [], []>} : vector<2x64xf32>, vector<64x256xf32>, vector<2x256xf32> -> vector<2x256xf32>
    %243 = vector.extract_strided_slice %5 {offsets = [10, 0], sizes = [2, 128], strides = [1, 1]} : vector<16x256xf32> to vector<2x128xf32>
    %244 = vector.extract_strided_slice %242 {offsets = [0, 0], sizes = [2, 128], strides = [1, 1]} : vector<2x256xf32> to vector<2x128xf32>
    %245 = arith.addf %243, %244 : vector<2x128xf32>
    %246 = vector.extract_strided_slice %5 {offsets = [4, 128], sizes = [2, 128], strides = [1, 1]} : vector<16x256xf32> to vector<2x128xf32>
    %247 = vector.extract_strided_slice %242 {offsets = [0, 128], sizes = [2, 128], strides = [1, 1]} : vector<2x256xf32> to vector<2x128xf32>
    %248 = arith.addf %246, %247 : vector<2x128xf32>
    %249 = arith.negf %245 : vector<2x128xf32>
    %250 = math.exp %249 : vector<2x128xf32>
    %cst_47 = arith.constant 1.000000e+00 : f32
    %251 = vector.broadcast %cst_47 : f32 to vector<2x128xf32>
    %252 = arith.addf %251, %250 : vector<2x128xf32>
    %253 = arith.divf %251, %252 : vector<2x128xf32>
    %254 = arith.negf %248 : vector<2x128xf32>
    %255 = math.exp %254 : vector<2x128xf32>
    %cst_48 = arith.constant 1.000000e+00 : f32
    %256 = vector.broadcast %cst_48 : f32 to vector<2x128xf32>
    %257 = arith.addf %256, %255 : vector<2x128xf32>
    %258 = arith.divf %256, %257 : vector<2x128xf32>
    %259 = vector.extract_strided_slice %253 {offsets = [0, 32], sizes = [2, 32], strides = [1, 1]} : vector<2x128xf32> to vector<2x32xf32>
    %260 = arith.mulf %259, %222 : vector<2x32xf32>
    %261 = vector.extract_strided_slice %253 {offsets = [0, 0], sizes = [2, 32], strides = [1, 1]} : vector<2x128xf32> to vector<2x32xf32>
    %262 = vector.extract_strided_slice %253 {offsets = [0, 64], sizes = [2, 32], strides = [1, 1]} : vector<2x128xf32> to vector<2x32xf32>
    %cst_49 = arith.constant 2.000000e+00 : f32
    %263 = vector.broadcast %cst_49 : f32 to vector<2x32xf32>
    %264 = arith.mulf %263, %262 : vector<2x32xf32>
    %cst_50 = arith.constant 1.000000e+00 : f32
    %265 = vector.broadcast %cst_50 : f32 to vector<2x32xf32>
    %266 = arith.subf %264, %265 : vector<2x32xf32>
    %267 = arith.mulf %261, %266 : vector<2x32xf32>
    %268 = arith.addf %260, %267 : vector<2x32xf32>
    %269 = vector.extract_strided_slice %258 {offsets = [0, 32], sizes = [2, 32], strides = [1, 1]} : vector<2x128xf32> to vector<2x32xf32>
    %270 = arith.mulf %269, %232 : vector<2x32xf32>
    %271 = vector.extract_strided_slice %258 {offsets = [0, 0], sizes = [2, 32], strides = [1, 1]} : vector<2x128xf32> to vector<2x32xf32>
    %272 = vector.extract_strided_slice %258 {offsets = [0, 64], sizes = [2, 32], strides = [1, 1]} : vector<2x128xf32> to vector<2x32xf32>
    %cst_51 = arith.constant 2.000000e+00 : f32
    %273 = vector.broadcast %cst_51 : f32 to vector<2x32xf32>
    %274 = arith.mulf %273, %272 : vector<2x32xf32>
    %cst_52 = arith.constant 1.000000e+00 : f32
    %275 = vector.broadcast %cst_52 : f32 to vector<2x32xf32>
    %276 = arith.subf %274, %275 : vector<2x32xf32>
    %277 = arith.mulf %271, %276 : vector<2x32xf32>
    %278 = arith.addf %270, %277 : vector<2x32xf32>
    %279 = tpu.concatenate %268, %278 in 1 : vector<2x32xf32>, vector<2x32xf32> -> vector<2x64xf32>
    %280 = math.tanh %279 : vector<2x64xf32>
    %281 = vector.extract_strided_slice %253 {offsets = [0, 96], sizes = [2, 32], strides = [1, 1]} : vector<2x128xf32> to vector<2x32xf32>
    %282 = vector.extract_strided_slice %280 {offsets = [0, 0], sizes = [2, 32], strides = [1, 1]} : vector<2x64xf32> to vector<2x32xf32>
    %283 = arith.mulf %281, %282 : vector<2x32xf32>
    %284 = vector.extract_strided_slice %258 {offsets = [0, 96], sizes = [2, 32], strides = [1, 1]} : vector<2x128xf32> to vector<2x32xf32>
    %285 = vector.extract_strided_slice %280 {offsets = [0, 32], sizes = [2, 32], strides = [1, 1]} : vector<2x64xf32> to vector<2x32xf32>
    %286 = arith.mulf %284, %285 : vector<2x32xf32>
    %287 = tpu.concatenate %283, %286 in 1 : vector<2x32xf32>, vector<2x32xf32> -> vector<2x64xf32>
    %cst_53 = arith.constant dense<0.000000e+00> : vector<2x256xf32>
    %288 = tpu.matmul %287, %6, %cst_53 {dimension_numbers = #tpu.dot_dimension_numbers<[1], [0], [0], [1], [0, 0, 1, 1], [], []>} : vector<2x64xf32>, vector<64x256xf32>, vector<2x256xf32> -> vector<2x256xf32>
    %289 = vector.extract_strided_slice %5 {offsets = [12, 0], sizes = [2, 128], strides = [1, 1]} : vector<16x256xf32> to vector<2x128xf32>
    %290 = vector.extract_strided_slice %288 {offsets = [0, 0], sizes = [2, 128], strides = [1, 1]} : vector<2x256xf32> to vector<2x128xf32>
    %291 = arith.addf %289, %290 : vector<2x128xf32>
    %292 = vector.extract_strided_slice %5 {offsets = [2, 128], sizes = [2, 128], strides = [1, 1]} : vector<16x256xf32> to vector<2x128xf32>
    %293 = vector.extract_strided_slice %288 {offsets = [0, 128], sizes = [2, 128], strides = [1, 1]} : vector<2x256xf32> to vector<2x128xf32>
    %294 = arith.addf %292, %293 : vector<2x128xf32>
    %295 = arith.negf %291 : vector<2x128xf32>
    %296 = math.exp %295 : vector<2x128xf32>
    %cst_54 = arith.constant 1.000000e+00 : f32
    %297 = vector.broadcast %cst_54 : f32 to vector<2x128xf32>
    %298 = arith.addf %297, %296 : vector<2x128xf32>
    %299 = arith.divf %297, %298 : vector<2x128xf32>
    %300 = arith.negf %294 : vector<2x128xf32>
    %301 = math.exp %300 : vector<2x128xf32>
    %cst_55 = arith.constant 1.000000e+00 : f32
    %302 = vector.broadcast %cst_55 : f32 to vector<2x128xf32>
    %303 = arith.addf %302, %301 : vector<2x128xf32>
    %304 = arith.divf %302, %303 : vector<2x128xf32>
    %305 = vector.extract_strided_slice %299 {offsets = [0, 32], sizes = [2, 32], strides = [1, 1]} : vector<2x128xf32> to vector<2x32xf32>
    %306 = arith.mulf %305, %268 : vector<2x32xf32>
    %307 = vector.extract_strided_slice %299 {offsets = [0, 0], sizes = [2, 32], strides = [1, 1]} : vector<2x128xf32> to vector<2x32xf32>
    %308 = vector.extract_strided_slice %299 {offsets = [0, 64], sizes = [2, 32], strides = [1, 1]} : vector<2x128xf32> to vector<2x32xf32>
    %cst_56 = arith.constant 2.000000e+00 : f32
    %309 = vector.broadcast %cst_56 : f32 to vector<2x32xf32>
    %310 = arith.mulf %309, %308 : vector<2x32xf32>
    %cst_57 = arith.constant 1.000000e+00 : f32
    %311 = vector.broadcast %cst_57 : f32 to vector<2x32xf32>
    %312 = arith.subf %310, %311 : vector<2x32xf32>
    %313 = arith.mulf %307, %312 : vector<2x32xf32>
    %314 = arith.addf %306, %313 : vector<2x32xf32>
    %315 = vector.extract_strided_slice %304 {offsets = [0, 32], sizes = [2, 32], strides = [1, 1]} : vector<2x128xf32> to vector<2x32xf32>
    %316 = arith.mulf %315, %278 : vector<2x32xf32>
    %317 = vector.extract_strided_slice %304 {offsets = [0, 0], sizes = [2, 32], strides = [1, 1]} : vector<2x128xf32> to vector<2x32xf32>
    %318 = vector.extract_strided_slice %304 {offsets = [0, 64], sizes = [2, 32], strides = [1, 1]} : vector<2x128xf32> to vector<2x32xf32>
    %cst_58 = arith.constant 2.000000e+00 : f32
    %319 = vector.broadcast %cst_58 : f32 to vector<2x32xf32>
    %320 = arith.mulf %319, %318 : vector<2x32xf32>
    %cst_59 = arith.constant 1.000000e+00 : f32
    %321 = vector.broadcast %cst_59 : f32 to vector<2x32xf32>
    %322 = arith.subf %320, %321 : vector<2x32xf32>
    %323 = arith.mulf %317, %322 : vector<2x32xf32>
    %324 = arith.addf %316, %323 : vector<2x32xf32>
    %325 = tpu.concatenate %314, %324 in 1 : vector<2x32xf32>, vector<2x32xf32> -> vector<2x64xf32>
    %326 = math.tanh %325 : vector<2x64xf32>
    %327 = vector.extract_strided_slice %299 {offsets = [0, 96], sizes = [2, 32], strides = [1, 1]} : vector<2x128xf32> to vector<2x32xf32>
    %328 = vector.extract_strided_slice %326 {offsets = [0, 0], sizes = [2, 32], strides = [1, 1]} : vector<2x64xf32> to vector<2x32xf32>
    %329 = arith.mulf %327, %328 : vector<2x32xf32>
    %330 = vector.extract_strided_slice %304 {offsets = [0, 96], sizes = [2, 32], strides = [1, 1]} : vector<2x128xf32> to vector<2x32xf32>
    %331 = vector.extract_strided_slice %326 {offsets = [0, 32], sizes = [2, 32], strides = [1, 1]} : vector<2x64xf32> to vector<2x32xf32>
    %332 = arith.mulf %330, %331 : vector<2x32xf32>
    %333 = tpu.concatenate %329, %332 in 1 : vector<2x32xf32>, vector<2x32xf32> -> vector<2x64xf32>
    %cst_60 = arith.constant dense<0.000000e+00> : vector<2x256xf32>
    %334 = tpu.matmul %333, %6, %cst_60 {dimension_numbers = #tpu.dot_dimension_numbers<[1], [0], [0], [1], [0, 0, 1, 1], [], []>} : vector<2x64xf32>, vector<64x256xf32>, vector<2x256xf32> -> vector<2x256xf32>
    %335 = vector.extract_strided_slice %5 {offsets = [14, 0], sizes = [2, 128], strides = [1, 1]} : vector<16x256xf32> to vector<2x128xf32>
    %336 = vector.extract_strided_slice %334 {offsets = [0, 0], sizes = [2, 128], strides = [1, 1]} : vector<2x256xf32> to vector<2x128xf32>
    %337 = arith.addf %335, %336 : vector<2x128xf32>
    %338 = vector.extract_strided_slice %5 {offsets = [0, 128], sizes = [2, 128], strides = [1, 1]} : vector<16x256xf32> to vector<2x128xf32>
    %339 = vector.extract_strided_slice %334 {offsets = [0, 128], sizes = [2, 128], strides = [1, 1]} : vector<2x256xf32> to vector<2x128xf32>
    %340 = arith.addf %338, %339 : vector<2x128xf32>
    %341 = arith.negf %337 : vector<2x128xf32>
    %342 = math.exp %341 : vector<2x128xf32>
    %cst_61 = arith.constant 1.000000e+00 : f32
    %343 = vector.broadcast %cst_61 : f32 to vector<2x128xf32>
    %344 = arith.addf %343, %342 : vector<2x128xf32>
    %345 = arith.divf %343, %344 : vector<2x128xf32>
    %346 = arith.negf %340 : vector<2x128xf32>
    %347 = math.exp %346 : vector<2x128xf32>
    %cst_62 = arith.constant 1.000000e+00 : f32
    %348 = vector.broadcast %cst_62 : f32 to vector<2x128xf32>
    %349 = arith.addf %348, %347 : vector<2x128xf32>
    %350 = arith.divf %348, %349 : vector<2x128xf32>
    %351 = vector.extract_strided_slice %345 {offsets = [0, 32], sizes = [2, 32], strides = [1, 1]} : vector<2x128xf32> to vector<2x32xf32>
    %352 = arith.mulf %351, %314 : vector<2x32xf32>
    %353 = vector.extract_strided_slice %345 {offsets = [0, 0], sizes = [2, 32], strides = [1, 1]} : vector<2x128xf32> to vector<2x32xf32>
    %354 = vector.extract_strided_slice %345 {offsets = [0, 64], sizes = [2, 32], strides = [1, 1]} : vector<2x128xf32> to vector<2x32xf32>
    %cst_63 = arith.constant 2.000000e+00 : f32
    %355 = vector.broadcast %cst_63 : f32 to vector<2x32xf32>
    %356 = arith.mulf %355, %354 : vector<2x32xf32>
    %cst_64 = arith.constant 1.000000e+00 : f32
    %357 = vector.broadcast %cst_64 : f32 to vector<2x32xf32>
    %358 = arith.subf %356, %357 : vector<2x32xf32>
    %359 = arith.mulf %353, %358 : vector<2x32xf32>
    %360 = arith.addf %352, %359 : vector<2x32xf32>
    %361 = vector.extract_strided_slice %350 {offsets = [0, 32], sizes = [2, 32], strides = [1, 1]} : vector<2x128xf32> to vector<2x32xf32>
    %362 = arith.mulf %361, %324 : vector<2x32xf32>
    %363 = vector.extract_strided_slice %350 {offsets = [0, 0], sizes = [2, 32], strides = [1, 1]} : vector<2x128xf32> to vector<2x32xf32>
    %364 = vector.extract_strided_slice %350 {offsets = [0, 64], sizes = [2, 32], strides = [1, 1]} : vector<2x128xf32> to vector<2x32xf32>
    %cst_65 = arith.constant 2.000000e+00 : f32
    %365 = vector.broadcast %cst_65 : f32 to vector<2x32xf32>
    %366 = arith.mulf %365, %364 : vector<2x32xf32>
    %cst_66 = arith.constant 1.000000e+00 : f32
    %367 = vector.broadcast %cst_66 : f32 to vector<2x32xf32>
    %368 = arith.subf %366, %367 : vector<2x32xf32>
    %369 = arith.mulf %363, %368 : vector<2x32xf32>
    %370 = arith.addf %362, %369 : vector<2x32xf32>
    %371 = tpu.concatenate %360, %370 in 1 : vector<2x32xf32>, vector<2x32xf32> -> vector<2x64xf32>
    %372 = math.tanh %371 : vector<2x64xf32>
    %373 = vector.extract_strided_slice %345 {offsets = [0, 96], sizes = [2, 32], strides = [1, 1]} : vector<2x128xf32> to vector<2x32xf32>
    %374 = vector.extract_strided_slice %372 {offsets = [0, 0], sizes = [2, 32], strides = [1, 1]} : vector<2x64xf32> to vector<2x32xf32>
    %375 = arith.mulf %373, %374 : vector<2x32xf32>
    %376 = vector.extract_strided_slice %350 {offsets = [0, 96], sizes = [2, 32], strides = [1, 1]} : vector<2x128xf32> to vector<2x32xf32>
    %377 = vector.extract_strided_slice %372 {offsets = [0, 32], sizes = [2, 32], strides = [1, 1]} : vector<2x64xf32> to vector<2x32xf32>
    %378 = arith.mulf %376, %377 : vector<2x32xf32>
    %379 = tpu.concatenate %53, %99, %145, %191, %237, %283, %329, %375 in 0 : vector<2x32xf32>, vector<2x32xf32>, vector<2x32xf32>, vector<2x32xf32>, vector<2x32xf32>, vector<2x32xf32>, vector<2x32xf32>, vector<2x32xf32> -> vector<16x32xf32>
    %380 = tpu.concatenate %378, %332, %286, %240, %194, %148, %102, %56 in 0 : vector<2x32xf32>, vector<2x32xf32>, vector<2x32xf32>, vector<2x32xf32>, vector<2x32xf32>, vector<2x32xf32>, vector<2x32xf32>, vector<2x32xf32> -> vector<16x32xf32>
    %381 = tpu.concatenate %379, %380 in 1 : vector<16x32xf32>, vector<16x32xf32> -> vector<16x64xf32>
    %382 = tpu.transpose %381, [1, 0] : vector<16x64xf32> -> vector<64x16xf32>
    %c0_67 = arith.constant 0 : index
    %c0_68 = arith.constant 0 : index
    %383 = vector.load %arg4[%c0_67, %c0_68] : memref<5x64xf32, #tpu.memory_space<vmem>>, vector<5x64xf32>
    %cst_69 = arith.constant dense<0.000000e+00> : vector<5x16xf32>
    %384 = tpu.matmul %383, %382, %cst_69 {dimension_numbers = #tpu.dot_dimension_numbers<[1], [0], [0], [1], [0, 0, 1, 1], [], []>} : vector<5x64xf32>, vector<64x16xf32>, vector<5x16xf32> -> vector<5x16xf32>
    %c0_70 = arith.constant 0 : index
    %c0_71 = arith.constant 0 : index
    %385 = vector.load %arg5[%c0_70, %c0_71] : memref<5x64xf32, #tpu.memory_space<vmem>>, vector<5x64xf32>
    %cst_72 = arith.constant dense<0.000000e+00> : vector<5x16xf32>
    %386 = tpu.matmul %385, %382, %cst_72 {dimension_numbers = #tpu.dot_dimension_numbers<[1], [0], [0], [1], [0, 0, 1, 1], [], []>} : vector<5x64xf32>, vector<64x16xf32>, vector<5x16xf32> -> vector<5x16xf32>
    %c0_73 = arith.constant 0 : index
    %c0_74 = arith.constant 0 : index
    %387 = vector.load %arg7[%c0_73, %c0_74] : memref<16x128xf32, #tpu.memory_space<vmem>>, vector<16x128xf32>
    %cst_75 = arith.constant dense<0.000000e+00> : vector<5x128xf32>
    %388 = tpu.matmul %384, %387, %cst_75 {dimension_numbers = #tpu.dot_dimension_numbers<[1], [0], [0], [1], [0, 0, 1, 1], [], []>} : vector<5x16xf32>, vector<16x128xf32>, vector<5x128xf32> -> vector<5x128xf32>
    %c0_76 = arith.constant 0 : index
    %c0_77 = arith.constant 0 : index
    %389 = vector.load %arg8[%c0_76, %c0_77] : memref<16x128xf32, #tpu.memory_space<vmem>>, vector<16x128xf32>
    %cst_78 = arith.constant dense<0.000000e+00> : vector<5x128xf32>
    %390 = tpu.matmul %386, %389, %cst_78 {dimension_numbers = #tpu.dot_dimension_numbers<[1], [0], [0], [1], [0, 0, 1, 1], [], []>} : vector<5x16xf32>, vector<16x128xf32>, vector<5x128xf32> -> vector<5x128xf32>
    %391 = arith.addf %388, %390 : vector<5x128xf32>
    %c0_79 = arith.constant 0 : index
    %c0_80 = arith.constant 0 : index
    %392 = vector.load %arg6[%c0_79, %c0_80] : memref<5x1xf32, #tpu.memory_space<vmem>>, vector<5x1xf32>
    %393 = vector.broadcast %392 : vector<5x1xf32> to vector<5x128xf32>
    %394 = arith.addf %391, %393 : vector<5x128xf32>
    %395 = vector.extract_strided_slice %394 {offsets = [0, 0], sizes = [1, 128], strides = [1, 1]} : vector<5x128xf32> to vector<1x128xf32>
    %396 = vector.extract_strided_slice %394 {offsets = [1, 0], sizes = [1, 128], strides = [1, 1]} : vector<5x128xf32> to vector<1x128xf32>
    %397 = arith.maximumf %395, %396 : vector<1x128xf32>
    %398 = vector.extract_strided_slice %394 {offsets = [2, 0], sizes = [1, 128], strides = [1, 1]} : vector<5x128xf32> to vector<1x128xf32>
    %399 = arith.maximumf %397, %398 : vector<1x128xf32>
    %400 = vector.extract_strided_slice %394 {offsets = [3, 0], sizes = [1, 128], strides = [1, 1]} : vector<5x128xf32> to vector<1x128xf32>
    %401 = arith.maximumf %399, %400 : vector<1x128xf32>
    %402 = vector.extract_strided_slice %394 {offsets = [4, 0], sizes = [1, 128], strides = [1, 1]} : vector<5x128xf32> to vector<1x128xf32>
    %403 = arith.maximumf %401, %402 : vector<1x128xf32>
    %404 = vector.broadcast %403 : vector<1x128xf32> to vector<5x128xf32>
    %405 = arith.subf %394, %404 : vector<5x128xf32>
    %406 = math.exp %405 : vector<5x128xf32>
    %407 = vector.extract_strided_slice %406 {offsets = [0, 0], sizes = [1, 128], strides = [1, 1]} : vector<5x128xf32> to vector<1x128xf32>
    %408 = vector.extract_strided_slice %406 {offsets = [1, 0], sizes = [1, 128], strides = [1, 1]} : vector<5x128xf32> to vector<1x128xf32>
    %409 = arith.addf %407, %408 : vector<1x128xf32>
    %410 = vector.extract_strided_slice %406 {offsets = [2, 0], sizes = [1, 128], strides = [1, 1]} : vector<5x128xf32> to vector<1x128xf32>
    %411 = arith.addf %409, %410 : vector<1x128xf32>
    %412 = vector.extract_strided_slice %406 {offsets = [3, 0], sizes = [1, 128], strides = [1, 1]} : vector<5x128xf32> to vector<1x128xf32>
    %413 = arith.addf %411, %412 : vector<1x128xf32>
    %414 = vector.extract_strided_slice %406 {offsets = [4, 0], sizes = [1, 128], strides = [1, 1]} : vector<5x128xf32> to vector<1x128xf32>
    %415 = arith.addf %413, %414 : vector<1x128xf32>
    %416 = tpu.reciprocal %415 : vector<1x128xf32> -> vector<1x128xf32>
    %417 = vector.broadcast %416 : vector<1x128xf32> to vector<5x128xf32>
    %418 = arith.mulf %406, %417 : vector<5x128xf32>
    %c0_81 = arith.constant 0 : index
    %c0_82 = arith.constant 0 : index
    %419 = vector.load %arg9[%c0_81, %c0_82] : memref<5x128xf32, #tpu.memory_space<vmem>>, vector<5x128xf32>
    tpu.vector_store %arg9[%c0_81, %c0_82], %418 {strides = array<i32>} : memref<5x128xf32, #tpu.memory_space<vmem>>, vector<5x128xf32>,
    return
  }
}

</mosaic_0001>

<llo_original>
// kernel: my_model_forward.1
$region0: #{my_model_forward.1}
  #allocation0 [shape = 'u32[]', space=smem, size = 0x4, offset = 0x4, fixed_abs, tag = 'smem constant byte address 0x4 - core index']
  #allocation1 [shape = 'u32[144,128]{1,0:T(1,128)}', space=vmem, size = 0x12000, scoped, tag = 'internal scratch']
  %s0 = inlined_call_operand.vmem [shape: f32[16,32], index: 0, kind: input, shape index: {}]
  %s1 = inlined_call_operand.vmem [shape: f32[32,256], index: 1, kind: input, shape index: {}]
  %s2 = inlined_call_operand.vmem [shape: f32[64,256], index: 2, kind: input, shape index: {}]
  %s3 = inlined_call_operand.vmem [shape: f32[1,256], index: 3, kind: input, shape index: {}]
  %s4 = inlined_call_operand.vmem [shape: f32[5,64], index: 4, kind: input, shape index: {}]
  %s5 = inlined_call_operand.vmem [shape: f32[5,64], index: 5, kind: input, shape index: {}]
  %s6 = inlined_call_operand.vmem [shape: f32[5,1], index: 6, kind: input, shape index: {}]
  %s7 = inlined_call_operand.vmem [shape: f32[16,128], index: 7, kind: input, shape index: {}]
  %s8 = inlined_call_operand.vmem [shape: f32[16,128], index: 8, kind: input, shape index: {}]
  %s9 = inlined_call_operand.vmem [shape: f32[5,128], index: 9, kind: output, shape index: {}]
  %s10 = sld [smem:[#allocation0]]
  $region46: #{my_model_forward.1} parent=0
    _
  %s12 = ssub.s32 1, %s10
  %s13 = scalar_select 0, %s12, %s10
  // Predicated region
  $region2: #{my_model_forward.1} parent=0 // pred_check
    _
  $region3: #{my_model_forward.1} parent=0 // pred_check_branch
    %15 = sbr.rel (0) target = $region5
  $region4: #{my_model_forward.1} parent=0 // pred_region
    _
  $region5: #{my_model_forward.1} parent=0 // pred_fallthru
    _
  // Predicated region
  $region6: #{my_model_forward.1} parent=0 // pred_check
    _
  $region7: #{my_model_forward.1} parent=0 // pred_check_branch
    %17 = sbr.rel (0) target = $region9
  $region8: #{my_model_forward.1} parent=0 // pred_region
    _
  $region9: #{my_model_forward.1} parent=0 // pred_fallthru
    _
  // Predicated region
  $region10: #{my_model_forward.1} parent=0 // pred_check
    _
  $region11: #{my_model_forward.1} parent=0 // pred_check_branch
    %19 = sbr.rel (0) target = $region13
  $region12: #{my_model_forward.1} parent=0 // pred_region
    _
  $region13: #{my_model_forward.1} parent=0 // pred_fallthru
    _
  // Predicated region
  $region14: #{my_model_forward.1} parent=0 // pred_check
    _
  $region15: #{my_model_forward.1} parent=0 // pred_check_branch
    %21 = sbr.rel (0) target = $region17
  $region16: #{my_model_forward.1} parent=0 // pred_region
    _
  $region17: #{my_model_forward.1} parent=0 // pred_fallthru
    _
  // Predicated region
  $region18: #{my_model_forward.1} parent=0 // pred_check
    _
  $region19: #{my_model_forward.1} parent=0 // pred_check_branch
    %23 = sbr.rel (0) target = $region21
  $region20: #{my_model_forward.1} parent=0 // pred_region
    _
  $region21: #{my_model_forward.1} parent=0 // pred_fallthru
    _
  // Predicated region
  $region22: #{my_model_forward.1} parent=0 // pred_check
    _
  $region23: #{my_model_forward.1} parent=0 // pred_check_branch
    %25 = sbr.rel (0) target = $region25
  $region24: #{my_model_forward.1} parent=0 // pred_region
    _
  $region25: #{my_model_forward.1} parent=0 // pred_fallthru
    _
  // Predicated region
  $region26: #{my_model_forward.1} parent=0 // pred_check
    _
  $region27: #{my_model_forward.1} parent=0 // pred_check_branch
    %27 = sbr.rel (0) target = $region29
  $region28: #{my_model_forward.1} parent=0 // pred_region
    _
  $region29: #{my_model_forward.1} parent=0 // pred_fallthru
    _
  // Predicated region
  $region30: #{my_model_forward.1} parent=0 // pred_check
    _
  $region31: #{my_model_forward.1} parent=0 // pred_check_branch
    %29 = sbr.rel (0) target = $region33
  $region32: #{my_model_forward.1} parent=0 // pred_region
    _
  $region33: #{my_model_forward.1} parent=0 // pred_fallthru
    _
  // Predicated region
  $region34: #{my_model_forward.1} parent=0 // pred_check
    _
  $region35: #{my_model_forward.1} parent=0 // pred_check_branch
    %31 = sbr.rel (0) target = $region37
  $region36: #{my_model_forward.1} parent=0 // pred_region
    _
  $region37: #{my_model_forward.1} parent=0 // pred_fallthru
    _
  %v32 = vld [vmem:[%s0] sm:$0xff]
  %v33 = vld [vmem:[%s0 + $0x8] sm:$0xff]
  %v34 = vld [vmem:[%s1] sm:$0xff]
  %v35 = vld [vmem:[%s1 + $0x8] sm:$0xff]
  %v36 = vld [vmem:[%s1 + $0x10] sm:$0xff]
  %v37 = vld [vmem:[%s1 + $0x18] sm:$0xff]
  %v38 = vld [vmem:[%s1 + $0x20] sm:$0xff]
  %v39 = vld [vmem:[%s1 + $0x28] sm:$0xff]
  %v40 = vld [vmem:[%s1 + $0x30] sm:$0xff]
  %v41 = vld [vmem:[%s1 + $0x38] sm:$0xff]
  %v42 = vld [vmem:[%s3] sm:$0x3]
  %v44 = vlaneseq
  %v45 = vshrl.u32 %v44, 7
  %v46 = vsub.s32 0, %v45
  %v47 = vrot.slane %v42, %v46
  %v48 = vlaneseq
  %v49 = vshrl.u32 %v48, 7
  %v50 = vsub.s32 1, %v49
  %v51 = vrot.slane %v42, %v50
  %vm54 = vcmask 261120
  %v56 = vsel %vm54, %v32, 0
  %v59 = vsel %vm54, %v33, 0
  %61 = vmatprep.subr.mxu0 %v35
  %62 = vmatpush1.msra.mxu0 %v34
  %63 = vmatprep.subr.mxu0 %v37
  %64 = vmatpush1.msra.mxu0 %v36
  %65 = vmatprep.subr.mxu0 %v39
  %66 = vmatpush1.msra.mxu0 %v38
  %67 = vmatprep.subr.mxu0 %v41
  %68 = vmatpush1.msra.mxu0 %v40
  %69 = vmatprep.subr.mxu0 0.0
  %70 = vmatpush1.msra.mxu0 0.0
  %71 = vmatprep.subr.mxu0 0.0
  %72 = vmatpush1.msra.mxu0 0.0
  %73 = vmatprep.subr.mxu0 0.0
  %74 = vmatpush1.msra.mxu0 0.0
  %75 = vmatprep.subr.mxu0 0.0
  %76 = vmatpush1.msra.mxu0 0.0
  %77 = vmatprep.subr.mxu0 0.0
  %78 = vmatpush1.msra.mxu0 0.0
  %79 = vmatprep.subr.mxu0 0.0
  %80 = vmatpush1.msra.mxu0 0.0
  %81 = vmatprep.subr.mxu0 0.0
  %82 = vmatpush1.msra.mxu0 0.0
  %83 = vmatprep.subr.mxu0 0.0
  %84 = vmatpush1.msra.mxu0 0.0
  %85 = vmatprep.subr.mxu0 0.0
  %86 = vmatpush1.msra.mxu0 0.0
  %87 = vmatprep.subr.mxu0 0.0
  %88 = vmatpush1.msra.mxu0 0.0
  %89 = vmatprep.subr.mxu0 0.0
  %90 = vmatpush1.msra.mxu0 0.0
  %91 = vmatprep.subr.mxu0 0.0
  %92 = vmatpush1.msra.mxu0 0.0
  %93 = vmatprep.subr.mxu0 0.0
  %94 = vmatpush1.msra.mxu0 0.0
  %95 = vmatprep.subr.mxu0 0.0
  %96 = vmatpush1.msra.mxu0 0.0
  %97 = vmatprep.subr.mxu0 0.0
  %98 = vmatpush1.msra.mxu0 0.0
  %99 = vmatprep.subr.mxu0 0.0
  %100 = vmatpush1.msra.mxu0 0.0
  %101 = vmatprep.subr.mxu0 0.0
  %102 = vmatpush1.msra.mxu0 0.0
  %103 = vmatprep.subr.mxu0 0.0
  %104 = vmatpush1.msra.mxu0 0.0
  %105 = vmatprep.subr.mxu0 0.0
  %106 = vmatpush1.msra.mxu0 0.0
  %107 = vmatprep.subr.mxu0 0.0
  %108 = vmatpush1.msra.mxu0 0.0
  %109 = vmatprep.subr.mxu0 0.0
  %110 = vmatpush1.msra.mxu0 0.0
  %111 = vmatprep.subr.mxu0 0.0
  %112 = vmatpush1.msra.mxu0 0.0
  %113 = vmatprep.subr.mxu0 0.0
  %114 = vmatpush1.msra.mxu0 0.0
  %115 = vmatprep.subr.mxu0 0.0
  %116 = vmatpush1.msra.mxu0 0.0
  %117 = vmatprep.subr.mxu0 0.0
  %118 = vmatpush1.msra.mxu0 0.0
  %119 = vmatprep.subr.mxu0 0.0
  %120 = vmatpush1.msra.mxu0 0.0
  %121 = vmatprep.subr.mxu0 0.0
  %122 = vmatpush1.msra.mxu0 0.0
  %123 = vmatprep.subr.mxu0 0.0
  %124 = vmatpush1.msra.mxu0 0.0
  %125 = vmatprep.mubr.f32.mxu0 0.0
  %126 = vmatmul.mubr.f32.gmra.mrb[0].mxu0 %v56
  %v127 = vpop.f32.mrb[0].mxu0
  %v128 = vadd.f32 %v47, %v127
  %v129 = vpop.f32.mrb[0].mxu0
  %v130 = vadd.f32 %v51, %v129
  %131 = vmatprep.mubr.f32.mxu0 0.0
  %132 = vmatmul.mubr.f32.gmra.mrb[0].mxu0 %v59
  %v133 = vpop.f32.mrb[0].mxu0
  %v134 = vadd.f32 %v47, %v133
  %v135 = vpop.f32.mrb[0].mxu0
  %v136 = vadd.f32 %v51, %v135
  %137 = vdwg.mxu0
  %v138 = vld [vmem:[%s2] sm:$0xff]
  %v139 = vld [vmem:[%s2 + $0x8] sm:$0xff]
  %v140 = vld [vmem:[%s2 + $0x10] sm:$0xff]
  %v141 = vld [vmem:[%s2 + $0x18] sm:$0xff]
  %v142 = vld [vmem:[%s2 + $0x20] sm:$0xff]
  %v143 = vld [vmem:[%s2 + $0x28] sm:$0xff]
  %v144 = vld [vmem:[%s2 + $0x30] sm:$0xff]
  %v145 = vld [vmem:[%s2 + $0x38] sm:$0xff]
  %v146 = vld [vmem:[%s2 + $0x40] sm:$0xff]
  %v147 = vld [vmem:[%s2 + $0x48] sm:$0xff]
  %v148 = vld [vmem:[%s2 + $0x50] sm:$0xff]
  %v149 = vld [vmem:[%s2 + $0x58] sm:$0xff]
  %v150 = vld [vmem:[%s2 + $0x60] sm:$0xff]
  %v151 = vld [vmem:[%s2 + $0x68] sm:$0xff]
  %v152 = vld [vmem:[%s2 + $0x70] sm:$0xff]
  %v153 = vld [vmem:[%s2 + $0x78] sm:$0xff]
  %vm154 = vcmask 523264
  %v156 = vsel %vm154, 0.0, 0
  %158 = vmatprep.subr.mxu0 %v139
  %159 = vmatpush1.msra.mxu0 %v138
  %160 = vmatprep.subr.mxu0 %v141
  %161 = vmatpush1.msra.mxu0 %v140
  %162 = vmatprep.subr.mxu0 %v143
  %163 = vmatpush1.msra.mxu0 %v142
  %164 = vmatprep.subr.mxu0 %v145
  %165 = vmatpush1.msra.mxu0 %v144
  %166 = vmatprep.subr.mxu0 %v147
  %167 = vmatpush1.msra.mxu0 %v146
  %168 = vmatprep.subr.mxu0 %v149
  %169 = vmatpush1.msra.mxu0 %v148
  %170 = vmatprep.subr.mxu0 %v151
  %171 = vmatpush1.msra.mxu0 %v150
  %172 = vmatprep.subr.mxu0 %v153
  %173 = vmatpush1.msra.mxu0 %v152
  %174 = vmatprep.subr.mxu0 0.0
  %175 = vmatpush1.msra.mxu0 0.0
  %176 = vmatprep.subr.mxu0 0.0
  %177 = vmatpush1.msra.mxu0 0.0
  %178 = vmatprep.subr.mxu0 0.0
  %179 = vmatpush1.msra.mxu0 0.0
  %180 = vmatprep.subr.mxu0 0.0
  %181 = vmatpush1.msra.mxu0 0.0
  %182 = vmatprep.subr.mxu0 0.0
  %183 = vmatpush1.msra.mxu0 0.0
  %184 = vmatprep.subr.mxu0 0.0
  %185 = vmatpush1.msra.mxu0 0.0
  %186 = vmatprep.subr.mxu0 0.0
  %187 = vmatpush1.msra.mxu0 0.0
  %188 = vmatprep.subr.mxu0 0.0
  %189 = vmatpush1.msra.mxu0 0.0
  %190 = vmatprep.subr.mxu0 0.0
  %191 = vmatpush1.msra.mxu0 0.0
  %192 = vmatprep.subr.mxu0 0.0
  %193 = vmatpush1.msra.mxu0 0.0
  %194 = vmatprep.subr.mxu0 0.0
  %195 = vmatpush1.msra.mxu0 0.0
  %196 = vmatprep.subr.mxu0 0.0
  %197 = vmatpush1.msra.mxu0 0.0
  %198 = vmatprep.subr.mxu0 0.0
  %199 = vmatpush1.msra.mxu0 0.0
  %200 = vmatprep.subr.mxu0 0.0
  %201 = vmatpush1.msra.mxu0 0.0
  %202 = vmatprep.subr.mxu0 0.0
  %203 = vmatpush1.msra.mxu0 0.0
  %204 = vmatprep.subr.mxu0 0.0
  %205 = vmatpush1.msra.mxu0 0.0
  %206 = vmatprep.subr.mxu0 0.0
  %207 = vmatpush1.msra.mxu0 0.0
  %208 = vmatprep.subr.mxu0 0.0
  %209 = vmatpush1.msra.mxu0 0.0
  %210 = vmatprep.subr.mxu0 0.0
  %211 = vmatpush1.msra.mxu0 0.0
  %212 = vmatprep.subr.mxu0 0.0
  %213 = vmatpush1.msra.mxu0 0.0
  %214 = vmatprep.subr.mxu0 0.0
  %215 = vmatpush1.msra.mxu0 0.0
  %216 = vmatprep.subr.mxu0 0.0
  %217 = vmatpush1.msra.mxu0 0.0
  %218 = vmatprep.subr.mxu0 0.0
  %219 = vmatpush1.msra.mxu0 0.0
  %220 = vmatprep.subr.mxu0 0.0
  %221 = vmatpush1.msra.mxu0 0.0
  %222 = vmatprep.mubr.f32.mxu0 0.0
  %223 = vmatmul.mubr.f32.gmra.mrb[0].mxu0 %v156
  %v224 = vpop.f32.mrb[0].mxu0
  %v225 = vadd.f32 0.0, %v224
  %v226 = vpop.f32.mrb[0].mxu0
  %v227 = vadd.f32 0.0, %v226
  %228 = vdwg.mxu0
  %v229 = vadd.f32 %v128, %v225
  %v231 = vrot.slane %v227, 2
  %v233 = vadd.f32 %v136, %v231
  %v234 = vxor.u32 %v229, 2147483648
  %v235 = vmul.f32 %v234, 1.442695
  %v236 = vpow.pop %v235
  %v237 = vadd.f32 %v236, 1.0
  %v238 = vrcp.pop %v237
  %v239 = vmul.f32 1.0, %v238
  %v240 = vxor.u32 %v233, 2147483648
  %v241 = vmul.f32 %v240, 1.442695
  %v242 = vpow.pop %v241
  %v243 = vadd.f32 %v242, 1.0
  %v244 = vrcp.pop %v243
  %v245 = vmul.f32 1.0, %v244
  %v246 = vmul.f32 %v239, 0.0
  %v247 = vmul.f32 %v239, 2.0
  %v248 = vsub.f32 %v247, 1.0
  %250 = vrot.lane.b32.xlu0 %v248, 64
  %v251 = vpop.permute.xlu0 %250
  %v253 = vmul.f32 %v239, %v251
  %255 = vrot.lane.b32.xlu0 %v253, 32
  %v256 = vpop.permute.xlu0 %255
  %v258 = vadd.f32 %v246, %v256
  %v259 = vmul.f32 %v245, 0.0
  %v260 = vmul.f32 %v245, 2.0
  %v261 = vsub.f32 %v260, 1.0
  %263 = vrot.lane.b32.xlu0 %v261, 64
  %v264 = vpop.permute.xlu0 %263
  %v266 = vmul.f32 %v245, %v264
  %268 = vrot.lane.b32.xlu0 %v266, 32
  %v269 = vpop.permute.xlu0 %268
  %v271 = vadd.f32 %v259, %v269
  %273 = vrot.lane.b32.xlu0 %v258, 96
  %v274 = vpop.permute.xlu0 %273
  %v277 = vrot.slane %v271, 6
  %v279 = vsel %vm54, %v274, %v277
  %v280 = vtanh.pop %v279
  %282 = vrot.lane.b32.xlu0 %v280, 96
  %v283 = vpop.permute.xlu0 %282
  %v285 = vmul.f32 %v239, %v283
  %v286 = vrot.slane %v280, 2
  %287 = vrot.lane.b32.xlu0 %v286, 64
  %v288 = vpop.permute.xlu0 %287
  %v290 = vmul.f32 %v245, %v288
  %292 = vrot.lane.b32.xlu0 %v285, 32
  %v293 = vpop.permute.xlu0 %292
  %v296 = vrot.slane %v290, 6
  %297 = vrot.lane.b32.xlu0 %v296, 64
  %v298 = vpop.permute.xlu0 %297
  %v300 = vsel %vm54, %v293, %v298
  %v302 = vsel %vm154, %v300, 0
  %304 = vmatprep.subr.mxu0 %v139
  %305 = vmatpush1.msra.mxu0 %v138
  %306 = vmatprep.subr.mxu0 %v141
  %307 = vmatpush1.msra.mxu0 %v140
  %308 = vmatprep.subr.mxu0 %v143
  %309 = vmatpush1.msra.mxu0 %v142
  %310 = vmatprep.subr.mxu0 %v145
  %311 = vmatpush1.msra.mxu0 %v144
  %312 = vmatprep.subr.mxu0 %v147
  %313 = vmatpush1.msra.mxu0 %v146
  %314 = vmatprep.subr.mxu0 %v149
  %315 = vmatpush1.msra.mxu0 %v148
  %316 = vmatprep.subr.mxu0 %v151
  %317 = vmatpush1.msra.mxu0 %v150
  %318 = vmatprep.subr.mxu0 %v153
  %319 = vmatpush1.msra.mxu0 %v152
  %320 = vmatprep.subr.mxu0 0.0
  %321 = vmatpush1.msra.mxu0 0.0
  %322 = vmatprep.subr.mxu0 0.0
  %323 = vmatpush1.msra.mxu0 0.0
  %324 = vmatprep.subr.mxu0 0.0
  %325 = vmatpush1.msra.mxu0 0.0
  %326 = vmatprep.subr.mxu0 0.0
  %327 = vmatpush1.msra.mxu0 0.0
  %328 = vmatprep.subr.mxu0 0.0
  %329 = vmatpush1.msra.mxu0 0.0
  %330 = vmatprep.subr.mxu0 0.0
  %331 = vmatpush1.msra.mxu0 0.0
  %332 = vmatprep.subr.mxu0 0.0
  %333 = vmatpush1.msra.mxu0 0.0
  %334 = vmatprep.subr.mxu0 0.0
  %335 = vmatpush1.msra.mxu0 0.0
  %336 = vmatprep.subr.mxu0 0.0
  %337 = vmatpush1.msra.mxu0 0.0
  %338 = vmatprep.subr.mxu0 0.0
  %339 = vmatpush1.msra.mxu0 0.0
  %340 = vmatprep.subr.mxu0 0.0
  %341 = vmatpush1.msra.mxu0 0.0
  %342 = vmatprep.subr.mxu0 0.0
  %343 = vmatpush1.msra.mxu0 0.0
  %344 = vmatprep.subr.mxu0 0.0
  %345 = vmatpush1.msra.mxu0 0.0
  %346 = vmatprep.subr.mxu0 0.0
  %347 = vmatpush1.msra.mxu0 0.0
  %348 = vmatprep.subr.mxu0 0.0
  %349 = vmatpush1.msra.mxu0 0.0
  %350 = vmatprep.subr.mxu0 0.0
  %351 = vmatpush1.msra.mxu0 0.0
  %352 = vmatprep.subr.mxu0 0.0
  %353 = vmatpush1.msra.mxu0 0.0
  %354 = vmatprep.subr.mxu0 0.0
  %355 = vmatpush1.msra.mxu0 0.0
  %356 = vmatprep.subr.mxu0 0.0
  %357 = vmatpush1.msra.mxu0 0.0
  %358 = vmatprep.subr.mxu0 0.0
  %359 = vmatpush1.msra.mxu0 0.0
  %360 = vmatprep.subr.mxu0 0.0
  %361 = vmatpush1.msra.mxu0 0.0
  %362 = vmatprep.subr.mxu0 0.0
  %363 = vmatpush1.msra.mxu0 0.0
  %364 = vmatprep.subr.mxu0 0.0
  %365 = vmatpush1.msra.mxu0 0.0
  %366 = vmatprep.subr.mxu0 0.0
  %367 = vmatpush1.msra.mxu0 0.0
  %368 = vmatprep.mubr.f32.mxu0 0.0
  %369 = vmatmul.mubr.f32.gmra.mrb[0].mxu0 %v302
  %v370 = vpop.f32.mrb[0].mxu0
  %v371 = vadd.f32 0.0, %v370
  %v372 = vpop.f32.mrb[0].mxu0
  %v373 = vadd.f32 0.0, %v372
  %374 = vdwg.mxu0
  %v376 = vrot.slane %v371, 6
  %v378 = vadd.f32 %v128, %v376
  %v380 = vrot.slane %v373, 4
  %v382 = vadd.f32 %v136, %v380
  %v383 = vxor.u32 %v378, 2147483648
  %v384 = vmul.f32 %v383, 1.442695
  %v385 = vpow.pop %v384
  %v386 = vadd.f32 %v385, 1.0
  %v387 = vrcp.pop %v386
  %v388 = vmul.f32 1.0, %v387
  %v389 = vxor.u32 %v382, 2147483648
  %v390 = vmul.f32 %v389, 1.442695
  %v391 = vpow.pop %v390
  %v392 = vadd.f32 %v391, 1.0
  %v393 = vrcp.pop %v392
  %v394 = vmul.f32 1.0, %v393
  %v395 = vrot.slane %v258, 6
  %v397 = vmul.f32 %v388, %v395
  %v398 = vmul.f32 %v388, 2.0
  %v399 = vsub.f32 %v398, 1.0
  %401 = vrot.lane.b32.xlu0 %v399, 64
  %v402 = vpop.permute.xlu0 %401
  %v404 = vmul.f32 %v388, %v402
  %406 = vrot.lane.b32.xlu0 %v404, 32
  %v407 = vpop.permute.xlu0 %406
  %v409 = vadd.f32 %v397, %v407
  %v410 = vrot.slane %v271, 2
  %v412 = vmul.f32 %v394, %v410
  %v413 = vmul.f32 %v394, 2.0
  %v414 = vsub.f32 %v413, 1.0
  %416 = vrot.lane.b32.xlu0 %v414, 64
  %v417 = vpop.permute.xlu0 %416
  %v419 = vmul.f32 %v394, %v417
  %421 = vrot.lane.b32.xlu0 %v419, 32
  %v422 = vpop.permute.xlu0 %421
  %v424 = vadd.f32 %v412, %v422
  %426 = vrot.lane.b32.xlu0 %v409, 96
  %v427 = vpop.permute.xlu0 %426
  %v430 = vrot.slane %v424, 2
  %v432 = vsel %vm54, %v427, %v430
  %v433 = vtanh.pop %v432
  %435 = vrot.lane.b32.xlu0 %v433, 96
  %v436 = vpop.permute.xlu0 %435
  %v438 = vmul.f32 %v388, %v436
  %v439 = vrot.slane %v433, 6
  %440 = vrot.lane.b32.xlu0 %v439, 64
  %v441 = vpop.permute.xlu0 %440
  %v443 = vmul.f32 %v394, %v441
  %445 = vrot.lane.b32.xlu0 %v438, 32
  %v446 = vpop.permute.xlu0 %445
  %v449 = vrot.slane %v443, 2
  %450 = vrot.lane.b32.xlu0 %v449, 64
  %v451 = vpop.permute.xlu0 %450
  %v453 = vsel %vm54, %v446, %v451
  %v455 = vrot.slane %v453, 2
  %v456 = vsel %vm154, %v455, 0
  %458 = vmatprep.subr.mxu0 %v139
  %459 = vmatpush1.msra.mxu0 %v138
  %460 = vmatprep.subr.mxu0 %v141
  %461 = vmatpush1.msra.mxu0 %v140
  %462 = vmatprep.subr.mxu0 %v143
  %463 = vmatpush1.msra.mxu0 %v142
  %464 = vmatprep.subr.mxu0 %v145
  %465 = vmatpush1.msra.mxu0 %v144
  %466 = vmatprep.subr.mxu0 %v147
  %467 = vmatpush1.msra.mxu0 %v146
  %468 = vmatprep.subr.mxu0 %v149
  %469 = vmatpush1.msra.mxu0 %v148
  %470 = vmatprep.subr.mxu0 %v151
  %471 = vmatpush1.msra.mxu0 %v150
  %472 = vmatprep.subr.mxu0 %v153
  %473 = vmatpush1.msra.mxu0 %v152
  %474 = vmatprep.subr.mxu0 0.0
  %475 = vmatpush1.msra.mxu0 0.0
  %476 = vmatprep.subr.mxu0 0.0
  %477 = vmatpush1.msra.mxu0 0.0
  %478 = vmatprep.subr.mxu0 0.0
  %479 = vmatpush1.msra.mxu0 0.0
  %480 = vmatprep.subr.mxu0 0.0
  %481 = vmatpush1.msra.mxu0 0.0
  %482 = vmatprep.subr.mxu0 0.0
  %483 = vmatpush1.msra.mxu0 0.0
  %484 = vmatprep.subr.mxu0 0.0
  %485 = vmatpush1.msra.mxu0 0.0
  %486 = vmatprep.subr.mxu0 0.0
  %487 = vmatpush1.msra.mxu0 0.0
  %488 = vmatprep.subr.mxu0 0.0
  %489 = vmatpush1.msra.mxu0 0.0
  %490 = vmatprep.subr.mxu0 0.0
  %491 = vmatpush1.msra.mxu0 0.0
  %492 = vmatprep.subr.mxu0 0.0
  %493 = vmatpush1.msra.mxu0 0.0
  %494 = vmatprep.subr.mxu0 0.0
  %495 = vmatpush1.msra.mxu0 0.0
  %496 = vmatprep.subr.mxu0 0.0
  %497 = vmatpush1.msra.mxu0 0.0
  %498 = vmatprep.subr.mxu0 0.0
  %499 = vmatpush1.msra.mxu0 0.0
  %500 = vmatprep.subr.mxu0 0.0
  %501 = vmatpush1.msra.mxu0 0.0
  %502 = vmatprep.subr.mxu0 0.0
  %503 = vmatpush1.msra.mxu0 0.0
  %504 = vmatprep.subr.mxu0 0.0
  %505 = vmatpush1.msra.mxu0 0.0
  %506 = vmatprep.subr.mxu0 0.0
  %507 = vmatpush1.msra.mxu0 0.0
  %508 = vmatprep.subr.mxu0 0.0
  %509 = vmatpush1.msra.mxu0 0.0
  %510 = vmatprep.subr.mxu0 0.0
  %511 = vmatpush1.msra.mxu0 0.0
  %512 = vmatprep.subr.mxu0 0.0
  %513 = vmatpush1.msra.mxu0 0.0
  %514 = vmatprep.subr.mxu0 0.0
  %515 = vmatpush1.msra.mxu0 0.0
  %516 = vmatprep.subr.mxu0 0.0
  %517 = vmatpush1.msra.mxu0 0.0
  %518 = vmatprep.subr.mxu0 0.0
  %519 = vmatpush1.msra.mxu0 0.0
  %520 = vmatprep.subr.mxu0 0.0
  %521 = vmatpush1.msra.mxu0 0.0
  %522 = vmatprep.mubr.f32.mxu0 0.0
  %523 = vmatmul.mubr.f32.gmra.mrb[0].mxu0 %v456
  %v524 = vpop.f32.mrb[0].mxu0
  %v525 = vadd.f32 0.0, %v524
  %v526 = vpop.f32.mrb[0].mxu0
  %v527 = vadd.f32 0.0, %v526
  %528 = vdwg.mxu0
  %v530 = vrot.slane %v525, 4
  %v532 = vadd.f32 %v128, %v530
  %v534 = vrot.slane %v527, 6
  %v536 = vadd.f32 %v136, %v534
  %v537 = vxor.u32 %v532, 2147483648
  %v538 = vmul.f32 %v537, 1.442695
  %v539 = vpow.pop %v538
  %v540 = vadd.f32 %v539, 1.0
  %v541 = vrcp.pop %v540
  %v542 = vmul.f32 1.0, %v541
  %v543 = vxor.u32 %v536, 2147483648
  %v544 = vmul.f32 %v543, 1.442695
  %v545 = vpow.pop %v544
  %v546 = vadd.f32 %v545, 1.0
  %v547 = vrcp.pop %v546
  %v548 = vmul.f32 1.0, %v547
  %v549 = vrot.slane %v409, 6
  %v551 = vmul.f32 %v542, %v549
  %v552 = vmul.f32 %v542, 2.0
  %v553 = vsub.f32 %v552, 1.0
  %555 = vrot.lane.b32.xlu0 %v553, 64
  %v556 = vpop.permute.xlu0 %555
  %v558 = vmul.f32 %v542, %v556
  %560 = vrot.lane.b32.xlu0 %v558, 32
  %v561 = vpop.permute.xlu0 %560
  %v563 = vadd.f32 %v551, %v561
  %v564 = vmul.f32 %v548, %v430
  %v565 = vmul.f32 %v548, 2.0
  %v566 = vsub.f32 %v565, 1.0
  %568 = vrot.lane.b32.xlu0 %v566, 64
  %v569 = vpop.permute.xlu0 %568
  %v571 = vmul.f32 %v548, %v569
  %573 = vrot.lane.b32.xlu0 %v571, 32
  %v574 = vpop.permute.xlu0 %573
  %v576 = vadd.f32 %v564, %v574
  %578 = vrot.lane.b32.xlu0 %v563, 96
  %v579 = vpop.permute.xlu0 %578
  %v582 = vrot.slane %v576, 6
  %v584 = vsel %vm54, %v579, %v582
  %v585 = vtanh.pop %v584
  %587 = vrot.lane.b32.xlu0 %v585, 96
  %v588 = vpop.permute.xlu0 %587
  %v590 = vmul.f32 %v542, %v588
  %v591 = vrot.slane %v585, 2
  %592 = vrot.lane.b32.xlu0 %v591, 64
  %v593 = vpop.permute.xlu0 %592
  %v595 = vmul.f32 %v548, %v593
  %597 = vrot.lane.b32.xlu0 %v590, 32
  %v598 = vpop.permute.xlu0 %597
  %v601 = vrot.slane %v595, 6
  %602 = vrot.lane.b32.xlu0 %v601, 64
  %v603 = vpop.permute.xlu0 %602
  %v605 = vsel %vm54, %v598, %v603
  %v607 = vrot.slane %v605, 4
  %v608 = vsel %vm154, %v607, 0
  %610 = vmatprep.subr.mxu0 %v139
  %611 = vmatpush1.msra.mxu0 %v138
  %612 = vmatprep.subr.mxu0 %v141
  %613 = vmatpush1.msra.mxu0 %v140
  %614 = vmatprep.subr.mxu0 %v143
  %615 = vmatpush1.msra.mxu0 %v142
  %616 = vmatprep.subr.mxu0 %v145
  %617 = vmatpush1.msra.mxu0 %v144
  %618 = vmatprep.subr.mxu0 %v147
  %619 = vmatpush1.msra.mxu0 %v146
  %620 = vmatprep.subr.mxu0 %v149
  %621 = vmatpush1.msra.mxu0 %v148
  %622 = vmatprep.subr.mxu0 %v151
  %623 = vmatpush1.msra.mxu0 %v150
  %624 = vmatprep.subr.mxu0 %v153
  %625 = vmatpush1.msra.mxu0 %v152
  %626 = vmatprep.subr.mxu0 0.0
  %627 = vmatpush1.msra.mxu0 0.0
  %628 = vmatprep.subr.mxu0 0.0
  %629 = vmatpush1.msra.mxu0 0.0
  %630 = vmatprep.subr.mxu0 0.0
  %631 = vmatpush1.msra.mxu0 0.0
  %632 = vmatprep.subr.mxu0 0.0
  %633 = vmatpush1.msra.mxu0 0.0
  %634 = vmatprep.subr.mxu0 0.0
  %635 = vmatpush1.msra.mxu0 0.0
  %636 = vmatprep.subr.mxu0 0.0
  %637 = vmatpush1.msra.mxu0 0.0
  %638 = vmatprep.subr.mxu0 0.0
  %639 = vmatpush1.msra.mxu0 0.0
  %640 = vmatprep.subr.mxu0 0.0
  %641 = vmatpush1.msra.mxu0 0.0
  %642 = vmatprep.subr.mxu0 0.0
  %643 = vmatpush1.msra.mxu0 0.0
  %644 = vmatprep.subr.mxu0 0.0
  %645 = vmatpush1.msra.mxu0 0.0
  %646 = vmatprep.subr.mxu0 0.0
  %647 = vmatpush1.msra.mxu0 0.0
  %648 = vmatprep.subr.mxu0 0.0
  %649 = vmatpush1.msra.mxu0 0.0
  %650 = vmatprep.subr.mxu0 0.0
  %651 = vmatpush1.msra.mxu0 0.0
  %652 = vmatprep.subr.mxu0 0.0
  %653 = vmatpush1.msra.mxu0 0.0
  %654 = vmatprep.subr.mxu0 0.0
  %655 = vmatpush1.msra.mxu0 0.0
  %656 = vmatprep.subr.mxu0 0.0
  %657 = vmatpush1.msra.mxu0 0.0
  %658 = vmatprep.subr.mxu0 0.0
  %659 = vmatpush1.msra.mxu0 0.0
  %660 = vmatprep.subr.mxu0 0.0
  %661 = vmatpush1.msra.mxu0 0.0
  %662 = vmatprep.subr.mxu0 0.0
  %663 = vmatpush1.msra.mxu0 0.0
  %664 = vmatprep.subr.mxu0 0.0
  %665 = vmatpush1.msra.mxu0 0.0
  %666 = vmatprep.subr.mxu0 0.0
  %667 = vmatpush1.msra.mxu0 0.0
  %668 = vmatprep.subr.mxu0 0.0
  %669 = vmatpush1.msra.mxu0 0.0
  %670 = vmatprep.subr.mxu0 0.0
  %671 = vmatpush1.msra.mxu0 0.0
  %672 = vmatprep.subr.mxu0 0.0
  %673 = vmatpush1.msra.mxu0 0.0
  %674 = vmatprep.mubr.f32.mxu0 0.0
  %675 = vmatmul.mubr.f32.gmra.mrb[0].mxu0 %v608
  %v676 = vpop.f32.mrb[0].mxu0
  %v677 = vadd.f32 0.0, %v676
  %v678 = vpop.f32.mrb[0].mxu0
  %v679 = vadd.f32 0.0, %v678
  %680 = vdwg.mxu0
  %v682 = vrot.slane %v677, 2
  %v684 = vadd.f32 %v128, %v682
  %v685 = vadd.f32 %v136, %v679
  %v686 = vxor.u32 %v684, 2147483648
  %v687 = vmul.f32 %v686, 1.442695
  %v688 = vpow.pop %v687
  %v689 = vadd.f32 %v688, 1.0
  %v690 = vrcp.pop %v689
  %v691 = vmul.f32 1.0, %v690
  %v692 = vxor.u32 %v685, 2147483648
  %v693 = vmul.f32 %v692, 1.442695
  %v694 = vpow.pop %v693
  %v695 = vadd.f32 %v694, 1.0
  %v696 = vrcp.pop %v695
  %v697 = vmul.f32 1.0, %v696
  %v698 = vrot.slane %v563, 6
  %v700 = vmul.f32 %v691, %v698
  %v701 = vmul.f32 %v691, 2.0
  %v702 = vsub.f32 %v701, 1.0
  %704 = vrot.lane.b32.xlu0 %v702, 64
  %v705 = vpop.permute.xlu0 %704
  %v707 = vmul.f32 %v691, %v705
  %709 = vrot.lane.b32.xlu0 %v707, 32
  %v710 = vpop.permute.xlu0 %709
  %v712 = vadd.f32 %v700, %v710
  %v713 = vrot.slane %v576, 2
  %v715 = vmul.f32 %v697, %v713
  %v716 = vmul.f32 %v697, 2.0
  %v717 = vsub.f32 %v716, 1.0
  %719 = vrot.lane.b32.xlu0 %v717, 64
  %v720 = vpop.permute.xlu0 %719
  %v722 = vmul.f32 %v697, %v720
  %724 = vrot.lane.b32.xlu0 %v722, 32
  %v725 = vpop.permute.xlu0 %724
  %v727 = vadd.f32 %v715, %v725
  %729 = vrot.lane.b32.xlu0 %v712, 96
  %v730 = vpop.permute.xlu0 %729
  %v733 = vrot.slane %v727, 2
  %v735 = vsel %vm54, %v730, %v733
  %v736 = vtanh.pop %v735
  %738 = vrot.lane.b32.xlu0 %v736, 96
  %v739 = vpop.permute.xlu0 %738
  %v741 = vmul.f32 %v691, %v739
  %v742 = vrot.slane %v736, 6
  %743 = vrot.lane.b32.xlu0 %v742, 64
  %v744 = vpop.permute.xlu0 %743
  %v746 = vmul.f32 %v697, %v744
  %748 = vrot.lane.b32.xlu0 %v741, 32
  %v749 = vpop.permute.xlu0 %748
  %v752 = vrot.slane %v746, 2
  %753 = vrot.lane.b32.xlu0 %v752, 64
  %v754 = vpop.permute.xlu0 %753
  %v756 = vsel %vm54, %v749, %v754
  %v758 = vrot.slane %v756, 6
  %v759 = vsel %vm154, %v758, 0
  %761 = vmatprep.subr.mxu0 %v139
  %762 = vmatpush1.msra.mxu0 %v138
  %763 = vmatprep.subr.mxu0 %v141
  %764 = vmatpush1.msra.mxu0 %v140
  %765 = vmatprep.subr.mxu0 %v143
  %766 = vmatpush1.msra.mxu0 %v142
  %767 = vmatprep.subr.mxu0 %v145
  %768 = vmatpush1.msra.mxu0 %v144
  %769 = vmatprep.subr.mxu0 %v147
  %770 = vmatpush1.msra.mxu0 %v146
  %771 = vmatprep.subr.mxu0 %v149
  %772 = vmatpush1.msra.mxu0 %v148
  %773 = vmatprep.subr.mxu0 %v151
  %774 = vmatpush1.msra.mxu0 %v150
  %775 = vmatprep.subr.mxu0 %v153
  %776 = vmatpush1.msra.mxu0 %v152
  %777 = vmatprep.subr.mxu0 0.0
  %778 = vmatpush1.msra.mxu0 0.0
  %779 = vmatprep.subr.mxu0 0.0
  %780 = vmatpush1.msra.mxu0 0.0
  %781 = vmatprep.subr.mxu0 0.0
  %782 = vmatpush1.msra.mxu0 0.0
  %783 = vmatprep.subr.mxu0 0.0
  %784 = vmatpush1.msra.mxu0 0.0
  %785 = vmatprep.subr.mxu0 0.0
  %786 = vmatpush1.msra.mxu0 0.0
  %787 = vmatprep.subr.mxu0 0.0
  %788 = vmatpush1.msra.mxu0 0.0
  %789 = vmatprep.subr.mxu0 0.0
  %790 = vmatpush1.msra.mxu0 0.0
  %791 = vmatprep.subr.mxu0 0.0
  %792 = vmatpush1.msra.mxu0 0.0
  %793 = vmatprep.subr.mxu0 0.0
  %794 = vmatpush1.msra.mxu0 0.0
  %795 = vmatprep.subr.mxu0 0.0
  %796 = vmatpush1.msra.mxu0 0.0
  %797 = vmatprep.subr.mxu0 0.0
  %798 = vmatpush1.msra.mxu0 0.0
  %799 = vmatprep.subr.mxu0 0.0
  %800 = vmatpush1.msra.mxu0 0.0
  %801 = vmatprep.subr.mxu0 0.0
  %802 = vmatpush1.msra.mxu0 0.0
  %803 = vmatprep.subr.mxu0 0.0
  %804 = vmatpush1.msra.mxu0 0.0
  %805 = vmatprep.subr.mxu0 0.0
  %806 = vmatpush1.msra.mxu0 0.0
  %807 = vmatprep.subr.mxu0 0.0
  %808 = vmatpush1.msra.mxu0 0.0
  %809 = vmatprep.subr.mxu0 0.0
  %810 = vmatpush1.msra.mxu0 0.0
  %811 = vmatprep.subr.mxu0 0.0
  %812 = vmatpush1.msra.mxu0 0.0
  %813 = vmatprep.subr.mxu0 0.0
  %814 = vmatpush1.msra.mxu0 0.0
  %815 = vmatprep.subr.mxu0 0.0
  %816 = vmatpush1.msra.mxu0 0.0
  %817 = vmatprep.subr.mxu0 0.0
  %818 = vmatpush1.msra.mxu0 0.0
  %819 = vmatprep.subr.mxu0 0.0
  %820 = vmatpush1.msra.mxu0 0.0
  %821 = vmatprep.subr.mxu0 0.0
  %822 = vmatpush1.msra.mxu0 0.0
  %823 = vmatprep.subr.mxu0 0.0
  %824 = vmatpush1.msra.mxu0 0.0
  %825 = vmatprep.mubr.f32.mxu0 0.0
  %826 = vmatmul.mubr.f32.gmra.mrb[0].mxu0 %v759
  %v827 = vpop.f32.mrb[0].mxu0
  %v828 = vadd.f32 0.0, %v827
  %v829 = vpop.f32.mrb[0].mxu0
  %v830 = vadd.f32 0.0, %v829
  %831 = vdwg.mxu0
  %v832 = vadd.f32 %v134, %v828
  %v834 = vrot.slane %v830, 2
  %v836 = vadd.f32 %v130, %v834
  %v837 = vxor.u32 %v832, 2147483648
  %v838 = vmul.f32 %v837, 1.442695
  %v839 = vpow.pop %v838
  %v840 = vadd.f32 %v839, 1.0
  %v841 = vrcp.pop %v840
  %v842 = vmul.f32 1.0, %v841
  %v843 = vxor.u32 %v836, 2147483648
  %v844 = vmul.f32 %v843, 1.442695
  %v845 = vpow.pop %v844
  %v846 = vadd.f32 %v845, 1.0
  %v847 = vrcp.pop %v846
  %v848 = vmul.f32 1.0, %v847
  %v849 = vrot.slane %v712, 6
  %v851 = vmul.f32 %v842, %v849
  %v852 = vmul.f32 %v842, 2.0
  %v853 = vsub.f32 %v852, 1.0
  %855 = vrot.lane.b32.xlu0 %v853, 64
  %v856 = vpop.permute.xlu0 %855
  %v858 = vmul.f32 %v842, %v856
  %860 = vrot.lane.b32.xlu0 %v858, 32
  %v861 = vpop.permute.xlu0 %860
  %v863 = vadd.f32 %v851, %v861
  %v864 = vmul.f32 %v848, %v733
  %v865 = vmul.f32 %v848, 2.0
  %v866 = vsub.f32 %v865, 1.0
  %868 = vrot.lane.b32.xlu0 %v866, 64
  %v869 = vpop.permute.xlu0 %868
  %v871 = vmul.f32 %v848, %v869
  %873 = vrot.lane.b32.xlu0 %v871, 32
  %v874 = vpop.permute.xlu0 %873
  %v876 = vadd.f32 %v864, %v874
  %878 = vrot.lane.b32.xlu0 %v863, 96
  %v879 = vpop.permute.xlu0 %878
  %v882 = vrot.slane %v876, 6
  %v884 = vsel %vm54, %v879, %v882
  %v885 = vtanh.pop %v884
  %887 = vrot.lane.b32.xlu0 %v885, 96
  %v888 = vpop.permute.xlu0 %887
  %v890 = vmul.f32 %v842, %v888
  %v891 = vrot.slane %v885, 2
  %892 = vrot.lane.b32.xlu0 %v891, 64
  %v893 = vpop.permute.xlu0 %892
  %v895 = vmul.f32 %v848, %v893
  %897 = vrot.lane.b32.xlu0 %v890, 32
  %v898 = vpop.permute.xlu0 %897
  %v901 = vrot.slane %v895, 6
  %902 = vrot.lane.b32.xlu0 %v901, 64
  %v903 = vpop.permute.xlu0 %902
  %v905 = vsel %vm54, %v898, %v903
  %v907 = vsel %vm154, %v905, 0
  %909 = vmatprep.subr.mxu0 %v139
  %910 = vmatpush1.msra.mxu0 %v138
  %911 = vmatprep.subr.mxu0 %v141
  %912 = vmatpush1.msra.mxu0 %v140
  %913 = vmatprep.subr.mxu0 %v143
  %914 = vmatpush1.msra.mxu0 %v142
  %915 = vmatprep.subr.mxu0 %v145
  %916 = vmatpush1.msra.mxu0 %v144
  %917 = vmatprep.subr.mxu0 %v147
  %918 = vmatpush1.msra.mxu0 %v146
  %919 = vmatprep.subr.mxu0 %v149
  %920 = vmatpush1.msra.mxu0 %v148
  %921 = vmatprep.subr.mxu0 %v151
  %922 = vmatpush1.msra.mxu0 %v150
  %923 = vmatprep.subr.mxu0 %v153
  %924 = vmatpush1.msra.mxu0 %v152
  %925 = vmatprep.subr.mxu0 0.0
  %926 = vmatpush1.msra.mxu0 0.0
  %927 = vmatprep.subr.mxu0 0.0
  %928 = vmatpush1.msra.mxu0 0.0
  %929 = vmatprep.subr.mxu0 0.0
  %930 = vmatpush1.msra.mxu0 0.0
  %931 = vmatprep.subr.mxu0 0.0
  %932 = vmatpush1.msra.mxu0 0.0
  %933 = vmatprep.subr.mxu0 0.0
  %934 = vmatpush1.msra.mxu0 0.0
  %935 = vmatprep.subr.mxu0 0.0
  %936 = vmatpush1.msra.mxu0 0.0
  %937 = vmatprep.subr.mxu0 0.0
  %938 = vmatpush1.msra.mxu0 0.0
  %939 = vmatprep.subr.mxu0 0.0
  %940 = vmatpush1.msra.mxu0 0.0
  %941 = vmatprep.subr.mxu0 0.0
  %942 = vmatpush1.msra.mxu0 0.0
  %943 = vmatprep.subr.mxu0 0.0
  %944 = vmatpush1.msra.mxu0 0.0
  %945 = vmatprep.subr.mxu0 0.0
  %946 = vmatpush1.msra.mxu0 0.0
  %947 = vmatprep.subr.mxu0 0.0
  %948 = vmatpush1.msra.mxu0 0.0
  %949 = vmatprep.subr.mxu0 0.0
  %950 = vmatpush1.msra.mxu0 0.0
  %951 = vmatprep.subr.mxu0 0.0
  %952 = vmatpush1.msra.mxu0 0.0
  %953 = vmatprep.subr.mxu0 0.0
  %954 = vmatpush1.msra.mxu0 0.0
  %955 = vmatprep.subr.mxu0 0.0
  %956 = vmatpush1.msra.mxu0 0.0
  %957 = vmatprep.subr.mxu0 0.0
  %958 = vmatpush1.msra.mxu0 0.0
  %959 = vmatprep.subr.mxu0 0.0
  %960 = vmatpush1.msra.mxu0 0.0
  %961 = vmatprep.subr.mxu0 0.0
  %962 = vmatpush1.msra.mxu0 0.0
  %963 = vmatprep.subr.mxu0 0.0
  %964 = vmatpush1.msra.mxu0 0.0
  %965 = vmatprep.subr.mxu0 0.0
  %966 = vmatpush1.msra.mxu0 0.0
  %967 = vmatprep.subr.mxu0 0.0
  %968 = vmatpush1.msra.mxu0 0.0
  %969 = vmatprep.subr.mxu0 0.0
  %970 = vmatpush1.msra.mxu0 0.0
  %971 = vmatprep.subr.mxu0 0.0
  %972 = vmatpush1.msra.mxu0 0.0
  %973 = vmatprep.mubr.f32.mxu0 0.0
  %974 = vmatmul.mubr.f32.gmra.mrb[0].mxu0 %v907
  %v975 = vpop.f32.mrb[0].mxu0
  %v976 = vadd.f32 0.0, %v975
  %v977 = vpop.f32.mrb[0].mxu0
  %v978 = vadd.f32 0.0, %v977
  %979 = vdwg.mxu0
  %v981 = vrot.slane %v976, 6
  %v983 = vadd.f32 %v134, %v981
  %v985 = vrot.slane %v978, 4
  %v987 = vadd.f32 %v130, %v985
  %v988 = vxor.u32 %v983, 2147483648
  %v989 = vmul.f32 %v988, 1.442695
  %v990 = vpow.pop %v989
  %v991 = vadd.f32 %v990, 1.0
  %v992 = vrcp.pop %v991
  %v993 = vmul.f32 1.0, %v992
  %v994 = vxor.u32 %v987, 2147483648
  %v995 = vmul.f32 %v994, 1.442695
  %v996 = vpow.pop %v995
  %v997 = vadd.f32 %v996, 1.0
  %v998 = vrcp.pop %v997
  %v999 = vmul.f32 1.0, %v998
  %v1000 = vrot.slane %v863, 6
  %v1002 = vmul.f32 %v993, %v1000
  %v1003 = vmul.f32 %v993, 2.0
  %v1004 = vsub.f32 %v1003, 1.0
  %1006 = vrot.lane.b32.xlu0 %v1004, 64
  %v1007 = vpop.permute.xlu0 %1006
  %v1009 = vmul.f32 %v993, %v1007
  %1011 = vrot.lane.b32.xlu0 %v1009, 32
  %v1012 = vpop.permute.xlu0 %1011
  %v1014 = vadd.f32 %v1002, %v1012
  %v1015 = vrot.slane %v876, 2
  %v1017 = vmul.f32 %v999, %v1015
  %v1018 = vmul.f32 %v999, 2.0
  %v1019 = vsub.f32 %v1018, 1.0
  %1021 = vrot.lane.b32.xlu0 %v1019, 64
  %v1022 = vpop.permute.xlu0 %1021
  %v1024 = vmul.f32 %v999, %v1022
  %1026 = vrot.lane.b32.xlu0 %v1024, 32
  %v1027 = vpop.permute.xlu0 %1026
  %v1029 = vadd.f32 %v1017, %v1027
  %1031 = vrot.lane.b32.xlu0 %v1014, 96
  %v1032 = vpop.permute.xlu0 %1031
  %v1035 = vrot.slane %v1029, 2
  %v1037 = vsel %vm54, %v1032, %v1035
  %v1038 = vtanh.pop %v1037
  %1040 = vrot.lane.b32.xlu0 %v1038, 96
  %v1041 = vpop.permute.xlu0 %1040
  %v1043 = vmul.f32 %v993, %v1041
  %v1044 = vrot.slane %v1038, 6
  %1045 = vrot.lane.b32.xlu0 %v1044, 64
  %v1046 = vpop.permute.xlu0 %1045
  %v1048 = vmul.f32 %v999, %v1046
  %1050 = vrot.lane.b32.xlu0 %v1043, 32
  %v1051 = vpop.permute.xlu0 %1050
  %v1054 = vrot.slane %v1048, 2
  %1055 = vrot.lane.b32.xlu0 %v1054, 64
  %v1056 = vpop.permute.xlu0 %1055
  %v1058 = vsel %vm54, %v1051, %v1056
  %v1060 = vrot.slane %v1058, 2
  %v1061 = vsel %vm154, %v1060, 0
  %1063 = vmatprep.subr.mxu0 %v139
  %1064 = vmatpush1.msra.mxu0 %v138
  %1065 = vmatprep.subr.mxu0 %v141
  %1066 = vmatpush1.msra.mxu0 %v140
  %1067 = vmatprep.subr.mxu0 %v143
  %1068 = vmatpush1.msra.mxu0 %v142
  %1069 = vmatprep.subr.mxu0 %v145
  %1070 = vmatpush1.msra.mxu0 %v144
  %1071 = vmatprep.subr.mxu0 %v147
  %1072 = vmatpush1.msra.mxu0 %v146
  %1073 = vmatprep.subr.mxu0 %v149
  %1074 = vmatpush1.msra.mxu0 %v148
  %1075 = vmatprep.subr.mxu0 %v151
  %1076 = vmatpush1.msra.mxu0 %v150
  %1077 = vmatprep.subr.mxu0 %v153
  %1078 = vmatpush1.msra.mxu0 %v152
  %1079 = vmatprep.subr.mxu0 0.0
  %1080 = vmatpush1.msra.mxu0 0.0
  %1081 = vmatprep.subr.mxu0 0.0
  %1082 = vmatpush1.msra.mxu0 0.0
  %1083 = vmatprep.subr.mxu0 0.0
  %1084 = vmatpush1.msra.mxu0 0.0
  %1085 = vmatprep.subr.mxu0 0.0
  %1086 = vmatpush1.msra.mxu0 0.0
  %1087 = vmatprep.subr.mxu0 0.0
  %1088 = vmatpush1.msra.mxu0 0.0
  %1089 = vmatprep.subr.mxu0 0.0
  %1090 = vmatpush1.msra.mxu0 0.0
  %1091 = vmatprep.subr.mxu0 0.0
  %1092 = vmatpush1.msra.mxu0 0.0
  %1093 = vmatprep.subr.mxu0 0.0
  %1094 = vmatpush1.msra.mxu0 0.0
  %1095 = vmatprep.subr.mxu0 0.0
  %1096 = vmatpush1.msra.mxu0 0.0
  %1097 = vmatprep.subr.mxu0 0.0
  %1098 = vmatpush1.msra.mxu0 0.0
  %1099 = vmatprep.subr.mxu0 0.0
  %1100 = vmatpush1.msra.mxu0 0.0
  %1101 = vmatprep.subr.mxu0 0.0
  %1102 = vmatpush1.msra.mxu0 0.0
  %1103 = vmatprep.subr.mxu0 0.0
  %1104 = vmatpush1.msra.mxu0 0.0
  %1105 = vmatprep.subr.mxu0 0.0
  %1106 = vmatpush1.msra.mxu0 0.0
  %1107 = vmatprep.subr.mxu0 0.0
  %1108 = vmatpush1.msra.mxu0 0.0
  %1109 = vmatprep.subr.mxu0 0.0
  %1110 = vmatpush1.msra.mxu0 0.0
  %1111 = vmatprep.subr.mxu0 0.0
  %1112 = vmatpush1.msra.mxu0 0.0
  %1113 = vmatprep.subr.mxu0 0.0
  %1114 = vmatpush1.msra.mxu0 0.0
  %1115 = vmatprep.subr.mxu0 0.0
  %1116 = vmatpush1.msra.mxu0 0.0
  %1117 = vmatprep.subr.mxu0 0.0
  %1118 = vmatpush1.msra.mxu0 0.0
  %1119 = vmatprep.subr.mxu0 0.0
  %1120 = vmatpush1.msra.mxu0 0.0
  %1121 = vmatprep.subr.mxu0 0.0
  %1122 = vmatpush1.msra.mxu0 0.0
  %1123 = vmatprep.subr.mxu0 0.0
  %1124 = vmatpush1.msra.mxu0 0.0
  %1125 = vmatprep.subr.mxu0 0.0
  %1126 = vmatpush1.msra.mxu0 0.0
  %1127 = vmatprep.mubr.f32.mxu0 0.0
  %1128 = vmatmul.mubr.f32.gmra.mrb[0].mxu0 %v1061
  %v1129 = vpop.f32.mrb[0].mxu0
  %v1130 = vadd.f32 0.0, %v1129
  %v1131 = vpop.f32.mrb[0].mxu0
  %v1132 = vadd.f32 0.0, %v1131
  %1133 = vdwg.mxu0
  %v1135 = vrot.slane %v1130, 4
  %v1137 = vadd.f32 %v134, %v1135
  %v1139 = vrot.slane %v1132, 6
  %v1141 = vadd.f32 %v130, %v1139
  %v1142 = vxor.u32 %v1137, 2147483648
  %v1143 = vmul.f32 %v1142, 1.442695
  %v1144 = vpow.pop %v1143
  %v1145 = vadd.f32 %v1144, 1.0
  %v1146 = vrcp.pop %v1145
  %v1147 = vmul.f32 1.0, %v1146
  %v1148 = vxor.u32 %v1141, 2147483648
  %v1149 = vmul.f32 %v1148, 1.442695
  %v1150 = vpow.pop %v1149
  %v1151 = vadd.f32 %v1150, 1.0
  %v1152 = vrcp.pop %v1151
  %v1153 = vmul.f32 1.0, %v1152
  %v1154 = vrot.slane %v1014, 6
  %v1156 = vmul.f32 %v1147, %v1154
  %v1157 = vmul.f32 %v1147, 2.0
  %v1158 = vsub.f32 %v1157, 1.0
  %1160 = vrot.lane.b32.xlu0 %v1158, 64
  %v1161 = vpop.permute.xlu0 %1160
  %v1163 = vmul.f32 %v1147, %v1161
  %1165 = vrot.lane.b32.xlu0 %v1163, 32
  %v1166 = vpop.permute.xlu0 %1165
  %v1168 = vadd.f32 %v1156, %v1166
  %v1169 = vmul.f32 %v1153, %v1035
  %v1170 = vmul.f32 %v1153, 2.0
  %v1171 = vsub.f32 %v1170, 1.0
  %1173 = vrot.lane.b32.xlu0 %v1171, 64
  %v1174 = vpop.permute.xlu0 %1173
  %v1176 = vmul.f32 %v1153, %v1174
  %1178 = vrot.lane.b32.xlu0 %v1176, 32
  %v1179 = vpop.permute.xlu0 %1178
  %v1181 = vadd.f32 %v1169, %v1179
  %1183 = vrot.lane.b32.xlu0 %v1168, 96
  %v1184 = vpop.permute.xlu0 %1183
  %v1187 = vrot.slane %v1181, 6
  %v1189 = vsel %vm54, %v1184, %v1187
  %v1190 = vtanh.pop %v1189
  %1192 = vrot.lane.b32.xlu0 %v1190, 96
  %v1193 = vpop.permute.xlu0 %1192
  %v1195 = vmul.f32 %v1147, %v1193
  %v1196 = vrot.slane %v1190, 2
  %1197 = vrot.lane.b32.xlu0 %v1196, 64
  %v1198 = vpop.permute.xlu0 %1197
  %v1200 = vmul.f32 %v1153, %v1198
  %1202 = vrot.lane.b32.xlu0 %v1195, 32
  %v1203 = vpop.permute.xlu0 %1202
  %v1206 = vrot.slane %v1200, 6
  %1207 = vrot.lane.b32.xlu0 %v1206, 64
  %v1208 = vpop.permute.xlu0 %1207
  %v1210 = vsel %vm54, %v1203, %v1208
  %v1212 = vrot.slane %v1210, 4
  %v1213 = vsel %vm154, %v1212, 0
  %1215 = vmatprep.subr.mxu0 %v139
  %1216 = vmatpush1.msra.mxu0 %v138
  %1217 = vmatprep.subr.mxu0 %v141
  %1218 = vmatpush1.msra.mxu0 %v140
  %1219 = vmatprep.subr.mxu0 %v143
  %1220 = vmatpush1.msra.mxu0 %v142
  %1221 = vmatprep.subr.mxu0 %v145
  %1222 = vmatpush1.msra.mxu0 %v144
  %1223 = vmatprep.subr.mxu0 %v147
  %1224 = vmatpush1.msra.mxu0 %v146
  %1225 = vmatprep.subr.mxu0 %v149
  %1226 = vmatpush1.msra.mxu0 %v148
  %1227 = vmatprep.subr.mxu0 %v151
  %1228 = vmatpush1.msra.mxu0 %v150
  %1229 = vmatprep.subr.mxu0 %v153
  %1230 = vmatpush1.msra.mxu0 %v152
  %1231 = vmatprep.subr.mxu0 0.0
  %1232 = vmatpush1.msra.mxu0 0.0
  %1233 = vmatprep.subr.mxu0 0.0
  %1234 = vmatpush1.msra.mxu0 0.0
  %1235 = vmatprep.subr.mxu0 0.0
  %1236 = vmatpush1.msra.mxu0 0.0
  %1237 = vmatprep.subr.mxu0 0.0
  %1238 = vmatpush1.msra.mxu0 0.0
  %1239 = vmatprep.subr.mxu0 0.0
  %1240 = vmatpush1.msra.mxu0 0.0
  %1241 = vmatprep.subr.mxu0 0.0
  %1242 = vmatpush1.msra.mxu0 0.0
  %1243 = vmatprep.subr.mxu0 0.0
  %1244 = vmatpush1.msra.mxu0 0.0
  %1245 = vmatprep.subr.mxu0 0.0
  %1246 = vmatpush1.msra.mxu0 0.0
  %1247 = vmatprep.subr.mxu0 0.0
  %1248 = vmatpush1.msra.mxu0 0.0
  %1249 = vmatprep.subr.mxu0 0.0
  %1250 = vmatpush1.msra.mxu0 0.0
  %1251 = vmatprep.subr.mxu0 0.0
  %1252 = vmatpush1.msra.mxu0 0.0
  %1253 = vmatprep.subr.mxu0 0.0
  %1254 = vmatpush1.msra.mxu0 0.0
  %1255 = vmatprep.subr.mxu0 0.0
  %1256 = vmatpush1.msra.mxu0 0.0
  %1257 = vmatprep.subr.mxu0 0.0
  %1258 = vmatpush1.msra.mxu0 0.0
  %1259 = vmatprep.subr.mxu0 0.0
  %1260 = vmatpush1.msra.mxu0 0.0
  %1261 = vmatprep.subr.mxu0 0.0
  %1262 = vmatpush1.msra.mxu0 0.0
  %1263 = vmatprep.subr.mxu0 0.0
  %1264 = vmatpush1.msra.mxu0 0.0
  %1265 = vmatprep.subr.mxu0 0.0
  %1266 = vmatpush1.msra.mxu0 0.0
  %1267 = vmatprep.subr.mxu0 0.0
  %1268 = vmatpush1.msra.mxu0 0.0
  %1269 = vmatprep.subr.mxu0 0.0
  %1270 = vmatpush1.msra.mxu0 0.0
  %1271 = vmatprep.subr.mxu0 0.0
  %1272 = vmatpush1.msra.mxu0 0.0
  %1273 = vmatprep.subr.mxu0 0.0
  %1274 = vmatpush1.msra.mxu0 0.0
  %1275 = vmatprep.subr.mxu0 0.0
  %1276 = vmatpush1.msra.mxu0 0.0
  %1277 = vmatprep.subr.mxu0 0.0
  %1278 = vmatpush1.msra.mxu0 0.0
  %1279 = vmatprep.mubr.f32.mxu0 0.0
  %1280 = vmatmul.mubr.f32.gmra.mrb[0].mxu0 %v1213
  %v1281 = vpop.f32.mrb[0].mxu0
  %v1282 = vadd.f32 0.0, %v1281
  %v1283 = vpop.f32.mrb[0].mxu0
  %v1284 = vadd.f32 0.0, %v1283
  %1285 = vdwg.mxu0
  %v1287 = vrot.slane %v1282, 2
  %v1289 = vadd.f32 %v134, %v1287
  %v1290 = vadd.f32 %v130, %v1284
  %v1291 = vxor.u32 %v1289, 2147483648
  %v1292 = vmul.f32 %v1291, 1.442695
  %v1293 = vpow.pop %v1292
  %v1294 = vadd.f32 %v1293, 1.0
  %v1295 = vrcp.pop %v1294
  %v1296 = vmul.f32 1.0, %v1295
  %v1297 = vxor.u32 %v1290, 2147483648
  %v1298 = vmul.f32 %v1297, 1.442695
  %v1299 = vpow.pop %v1298
  %v1300 = vadd.f32 %v1299, 1.0
  %v1301 = vrcp.pop %v1300
  %v1302 = vmul.f32 1.0, %v1301
  %v1303 = vrot.slane %v1168, 6
  %v1305 = vmul.f32 %v1296, %v1303
  %v1306 = vmul.f32 %v1296, 2.0
  %v1307 = vsub.f32 %v1306, 1.0
  %1309 = vrot.lane.b32.xlu0 %v1307, 64
  %v1310 = vpop.permute.xlu0 %1309
  %v1312 = vmul.f32 %v1296, %v1310
  %1314 = vrot.lane.b32.xlu0 %v1312, 32
  %v1315 = vpop.permute.xlu0 %1314
  %v1317 = vadd.f32 %v1305, %v1315
  %v1318 = vrot.slane %v1181, 2
  %v1320 = vmul.f32 %v1302, %v1318
  %v1321 = vmul.f32 %v1302, 2.0
  %v1322 = vsub.f32 %v1321, 1.0
  %1324 = vrot.lane.b32.xlu0 %v1322, 64
  %v1325 = vpop.permute.xlu0 %1324
  %v1327 = vmul.f32 %v1302, %v1325
  %1329 = vrot.lane.b32.xlu0 %v1327, 32
  %v1330 = vpop.permute.xlu0 %1329
  %v1332 = vadd.f32 %v1320, %v1330
  %1334 = vrot.lane.b32.xlu0 %v1317, 96
  %v1335 = vpop.permute.xlu0 %1334
  %v1338 = vrot.slane %v1332, 2
  %v1340 = vsel %vm54, %v1335, %v1338
  %v1341 = vtanh.pop %v1340
  %1343 = vrot.lane.b32.xlu0 %v1341, 96
  %v1344 = vpop.permute.xlu0 %1343
  %v1346 = vmul.f32 %v1296, %v1344
  %v1347 = vrot.slane %v1341, 6
  %1348 = vrot.lane.b32.xlu0 %v1347, 64
  %v1349 = vpop.permute.xlu0 %1348
  %v1351 = vmul.f32 %v1302, %v1349
  %vm1352 = vcmask 1041408
  %v1353 = vsel %vm1352, %v285, %v438
  %vm1354 = vcmask 1043456
  %v1355 = vsel %vm1354, %v1353, %v590
  %vm1356 = vcmask 1045504
  %v1357 = vsel %vm1356, %v1355, %v741
  %v1358 = vsel %vm1352, %v890, %v1043
  %v1359 = vsel %vm1354, %v1358, %v1195
  %v1360 = vsel %vm1356, %v1359, %v1346
  %v1361 = vsel %vm1352, %v1351, %v1200
  %v1362 = vsel %vm1354, %v1361, %v1048
  %v1363 = vsel %vm1356, %v1362, %v895
  %v1364 = vsel %vm1352, %v746, %v595
  %v1365 = vsel %vm1354, %v1364, %v443
  %v1366 = vsel %vm1356, %v1365, %v290
  %1369 = vrot.lane.b32.xlu0 %v1357, 32
  %v1370 = vpop.permute.xlu0 %1369
  %1371 = vrot.lane.b32.xlu0 %v1360, 32
  %v1372 = vpop.permute.xlu0 %1371
  %1377 = vrot.lane.b32.xlu0 %v1363, 64
  %v1378 = vpop.permute.xlu0 %1377
  %1379 = vrot.lane.b32.xlu0 %v1366, 64
  %v1380 = vpop.permute.xlu0 %1379
  %v1383 = vsel %vm54, %v1370, %v1378
  %v1384 = vsel %vm54, %v1372, %v1380
  %v1385 = vld [vmem:[%s4] sm:$0x1f]
  %v1387 = vsel %vm154, %v1385, 0
  %v1390 = vsel %vm154, %v1383, 0
  %v1393 = vsel %vm154, %v1384, 0
  %1395 = vmatprep.subr.mxu0 0.0
  %1396 = vmatpush1.xpose.msra.mxu0 %v1390
  %1397 = vmatprep.subr.mxu0 0.0
  %1398 = vmatpush1.xpose.msra.mxu0 %v1393
  %1399 = vmatprep.subr.mxu0 0.0
  %1400 = vmatpush1.xpose.msra.mxu0 0.0
  %1401 = vmatprep.subr.mxu0 0.0
  %1402 = vmatpush1.xpose.msra.mxu0 0.0
  %1403 = vmatprep.subr.mxu0 0.0
  %1404 = vmatpush1.xpose.msra.mxu0 0.0
  %1405 = vmatprep.subr.mxu0 0.0
  %1406 = vmatpush1.xpose.msra.mxu0 0.0
  %1407 = vmatprep.subr.mxu0 0.0
  %1408 = vmatpush1.xpose.msra.mxu0 0.0
  %1409 = vmatprep.subr.mxu0 0.0
  %1410 = vmatpush1.xpose.msra.mxu0 0.0
  %1411 = vmatprep.subr.mxu0 0.0
  %1412 = vmatpush1.xpose.msra.mxu0 0.0
  %1413 = vmatprep.subr.mxu0 0.0
  %1414 = vmatpush1.xpose.msra.mxu0 0.0
  %1415 = vmatprep.subr.mxu0 0.0
  %1416 = vmatpush1.xpose.msra.mxu0 0.0
  %1417 = vmatprep.subr.mxu0 0.0
  %1418 = vmatpush1.xpose.msra.mxu0 0.0
  %1419 = vmatprep.subr.mxu0 0.0
  %1420 = vmatpush1.xpose.msra.mxu0 0.0
  %1421 = vmatprep.subr.mxu0 0.0
  %1422 = vmatpush1.xpose.msra.mxu0 0.0
  %1423 = vmatprep.subr.mxu0 0.0
  %1424 = vmatpush1.xpose.msra.mxu0 0.0
  %1425 = vmatprep.subr.mxu0 0.0
  %1426 = vmatpush1.xpose.msra.mxu0 0.0
  %1427 = vmatprep.subr.mxu0 0.0
  %1428 = vmatpush1.xpose.msra.mxu0 0.0
  %1429 = vmatprep.subr.mxu0 0.0
  %1430 = vmatpush1.xpose.msra.mxu0 0.0
  %1431 = vmatprep.subr.mxu0 0.0
  %1432 = vmatpush1.xpose.msra.mxu0 0.0
  %1433 = vmatprep.subr.mxu0 0.0
  %1434 = vmatpush1.xpose.msra.mxu0 0.0
  %1435 = vmatprep.subr.mxu0 0.0
  %1436 = vmatpush1.xpose.msra.mxu0 0.0
  %1437 = vmatprep.subr.mxu0 0.0
  %1438 = vmatpush1.xpose.msra.mxu0 0.0
  %1439 = vmatprep.subr.mxu0 0.0
  %1440 = vmatpush1.xpose.msra.mxu0 0.0
  %1441 = vmatprep.subr.mxu0 0.0
  %1442 = vmatpush1.xpose.msra.mxu0 0.0
  %1443 = vmatprep.subr.mxu0 0.0
  %1444 = vmatpush1.xpose.msra.mxu0 0.0
  %1445 = vmatprep.subr.mxu0 0.0
  %1446 = vmatpush1.xpose.msra.mxu0 0.0
  %1447 = vmatprep.subr.mxu0 0.0
  %1448 = vmatpush1.xpose.msra.mxu0 0.0
  %1449 = vmatprep.subr.mxu0 0.0
  %1450 = vmatpush1.xpose.msra.mxu0 0.0
  %1451 = vmatprep.subr.mxu0 0.0
  %1452 = vmatpush1.xpose.msra.mxu0 0.0
  %1453 = vmatprep.subr.mxu0 0.0
  %1454 = vmatpush1.xpose.msra.mxu0 0.0
  %1455 = vmatprep.subr.mxu0 0.0
  %1456 = vmatpush1.xpose.msra.mxu0 0.0
  %1457 = vmatprep.subr.mxu0 0.0
  %1458 = vmatpush1.xpose.msra.mxu0 0.0
  %1459 = vmatprep.mubr.f32.mxu0 0.0
  %1460 = vmatmul.mubr.f32.gmra.mrb[0].mxu0 %v1387
  %v1461 = vpop.f32.mrb[0].mxu0
  %v1462 = vadd.f32 0.0, %v1461
  %v1463 = vpop.f32.mrb[0].mxu0
  %1464 = vdwg.mxu0
  %v1465 = vld [vmem:[%s5] sm:$0x1f]
  %v1467 = vsel %vm154, %v1465, 0
  %1469 = vmatprep.subr.mxu0 0.0
  %1470 = vmatpush1.xpose.msra.mxu0 %v1390
  %1471 = vmatprep.subr.mxu0 0.0
  %1472 = vmatpush1.xpose.msra.mxu0 %v1393
  %1473 = vmatprep.subr.mxu0 0.0
  %1474 = vmatpush1.xpose.msra.mxu0 0.0
  %1475 = vmatprep.subr.mxu0 0.0
  %1476 = vmatpush1.xpose.msra.mxu0 0.0
  %1477 = vmatprep.subr.mxu0 0.0
  %1478 = vmatpush1.xpose.msra.mxu0 0.0
  %1479 = vmatprep.subr.mxu0 0.0
  %1480 = vmatpush1.xpose.msra.mxu0 0.0
  %1481 = vmatprep.subr.mxu0 0.0
  %1482 = vmatpush1.xpose.msra.mxu0 0.0
  %1483 = vmatprep.subr.mxu0 0.0
  %1484 = vmatpush1.xpose.msra.mxu0 0.0
  %1485 = vmatprep.subr.mxu0 0.0
  %1486 = vmatpush1.xpose.msra.mxu0 0.0
  %1487 = vmatprep.subr.mxu0 0.0
  %1488 = vmatpush1.xpose.msra.mxu0 0.0
  %1489 = vmatprep.subr.mxu0 0.0
  %1490 = vmatpush1.xpose.msra.mxu0 0.0
  %1491 = vmatprep.subr.mxu0 0.0
  %1492 = vmatpush1.xpose.msra.mxu0 0.0
  %1493 = vmatprep.subr.mxu0 0.0
  %1494 = vmatpush1.xpose.msra.mxu0 0.0
  %1495 = vmatprep.subr.mxu0 0.0
  %1496 = vmatpush1.xpose.msra.mxu0 0.0
  %1497 = vmatprep.subr.mxu0 0.0
  %1498 = vmatpush1.xpose.msra.mxu0 0.0
  %1499 = vmatprep.subr.mxu0 0.0
  %1500 = vmatpush1.xpose.msra.mxu0 0.0
  %1501 = vmatprep.subr.mxu0 0.0
  %1502 = vmatpush1.xpose.msra.mxu0 0.0
  %1503 = vmatprep.subr.mxu0 0.0
  %1504 = vmatpush1.xpose.msra.mxu0 0.0
  %1505 = vmatprep.subr.mxu0 0.0
  %1506 = vmatpush1.xpose.msra.mxu0 0.0
  %1507 = vmatprep.subr.mxu0 0.0
  %1508 = vmatpush1.xpose.msra.mxu0 0.0
  %1509 = vmatprep.subr.mxu0 0.0
  %1510 = vmatpush1.xpose.msra.mxu0 0.0
  %1511 = vmatprep.subr.mxu0 0.0
  %1512 = vmatpush1.xpose.msra.mxu0 0.0
  %1513 = vmatprep.subr.mxu0 0.0
  %1514 = vmatpush1.xpose.msra.mxu0 0.0
  %1515 = vmatprep.subr.mxu0 0.0
  %1516 = vmatpush1.xpose.msra.mxu0 0.0
  %1517 = vmatprep.subr.mxu0 0.0
  %1518 = vmatpush1.xpose.msra.mxu0 0.0
  %1519 = vmatprep.subr.mxu0 0.0
  %1520 = vmatpush1.xpose.msra.mxu0 0.0
  %1521 = vmatprep.subr.mxu0 0.0
  %1522 = vmatpush1.xpose.msra.mxu0 0.0
  %1523 = vmatprep.subr.mxu0 0.0
  %1524 = vmatpush1.xpose.msra.mxu0 0.0
  %1525 = vmatprep.subr.mxu0 0.0
  %1526 = vmatpush1.xpose.msra.mxu0 0.0
  %1527 = vmatprep.subr.mxu0 0.0
  %1528 = vmatpush1.xpose.msra.mxu0 0.0
  %1529 = vmatprep.subr.mxu0 0.0
  %1530 = vmatpush1.xpose.msra.mxu0 0.0
  %1531 = vmatprep.subr.mxu0 0.0
  %1532 = vmatpush1.xpose.msra.mxu0 0.0
  %1533 = vmatprep.mubr.f32.mxu0 0.0
  %1534 = vmatmul.mubr.f32.gmra.mrb[0].mxu0 %v1467
  %v1535 = vpop.f32.mrb[0].mxu0
  %v1536 = vadd.f32 0.0, %v1535
  %v1537 = vpop.f32.mrb[0].mxu0
  %1538 = vdwg.mxu0
  %v1539 = vld [vmem:[%s7] sm:$0xff]
  %v1540 = vld [vmem:[%s7 + $0x8] sm:$0xff]
  %v1541 = vld [vmem:[%s8] sm:$0xff]
  %v1542 = vld [vmem:[%s8 + $0x8] sm:$0xff]
  %vm1543 = vcmask 130048
  %v1545 = vsel %vm1543, %v1536, 0
  %1547 = vmatprep.subr.mxu0 0.0
  %1548 = vmatpush1.msra.mxu0 %v1541
  %1549 = vmatprep.subr.mxu0 0.0
  %1550 = vmatpush1.msra.mxu0 %v1542
  %1551 = vmatprep.subr.mxu0 0.0
  %1552 = vmatpush1.msra.mxu0 0.0
  %1553 = vmatprep.subr.mxu0 0.0
  %1554 = vmatpush1.msra.mxu0 0.0
  %1555 = vmatprep.subr.mxu0 0.0
  %1556 = vmatpush1.msra.mxu0 0.0
  %1557 = vmatprep.subr.mxu0 0.0
  %1558 = vmatpush1.msra.mxu0 0.0
  %1559 = vmatprep.subr.mxu0 0.0
  %1560 = vmatpush1.msra.mxu0 0.0
  %1561 = vmatprep.subr.mxu0 0.0
  %1562 = vmatpush1.msra.mxu0 0.0
  %1563 = vmatprep.subr.mxu0 0.0
  %1564 = vmatpush1.msra.mxu0 0.0
  %1565 = vmatprep.subr.mxu0 0.0
  %1566 = vmatpush1.msra.mxu0 0.0
  %1567 = vmatprep.subr.mxu0 0.0
  %1568 = vmatpush1.msra.mxu0 0.0
  %1569 = vmatprep.subr.mxu0 0.0
  %1570 = vmatpush1.msra.mxu0 0.0
  %1571 = vmatprep.subr.mxu0 0.0
  %1572 = vmatpush1.msra.mxu0 0.0
  %1573 = vmatprep.subr.mxu0 0.0
  %1574 = vmatpush1.msra.mxu0 0.0
  %1575 = vmatprep.subr.mxu0 0.0
  %1576 = vmatpush1.msra.mxu0 0.0
  %1577 = vmatprep.subr.mxu0 0.0
  %1578 = vmatpush1.msra.mxu0 0.0
  %1579 = vmatprep.subr.mxu0 0.0
  %1580 = vmatpush1.msra.mxu0 0.0
  %1581 = vmatprep.subr.mxu0 0.0
  %1582 = vmatpush1.msra.mxu0 0.0
  %1583 = vmatprep.subr.mxu0 0.0
  %1584 = vmatpush1.msra.mxu0 0.0
  %1585 = vmatprep.subr.mxu0 0.0
  %1586 = vmatpush1.msra.mxu0 0.0
  %1587 = vmatprep.subr.mxu0 0.0
  %1588 = vmatpush1.msra.mxu0 0.0
  %1589 = vmatprep.subr.mxu0 0.0
  %1590 = vmatpush1.msra.mxu0 0.0
  %1591 = vmatprep.subr.mxu0 0.0
  %1592 = vmatpush1.msra.mxu0 0.0
  %1593 = vmatprep.subr.mxu0 0.0
  %1594 = vmatpush1.msra.mxu0 0.0
  %1595 = vmatprep.subr.mxu0 0.0
  %1596 = vmatpush1.msra.mxu0 0.0
  %1597 = vmatprep.subr.mxu0 0.0
  %1598 = vmatpush1.msra.mxu0 0.0
  %1599 = vmatprep.subr.mxu0 0.0
  %1600 = vmatpush1.msra.mxu0 0.0
  %1601 = vmatprep.subr.mxu0 0.0
  %1602 = vmatpush1.msra.mxu0 0.0
  %1603 = vmatprep.subr.mxu0 0.0
  %1604 = vmatpush1.msra.mxu0 0.0
  %1605 = vmatprep.subr.mxu0 0.0
  %1606 = vmatpush1.msra.mxu0 0.0
  %1607 = vmatprep.subr.mxu0 0.0
  %1608 = vmatpush1.msra.mxu0 0.0
  %1609 = vmatprep.subr.mxu0 0.0
  %1610 = vmatpush1.msra.mxu0 0.0
  %1611 = vmatprep.mubr.f32.mxu0 0.0
  %1612 = vmatmul.mubr.f32.gmra.mrb[0].mxu0 %v1545
  %v1613 = vpop.f32.mrb[0].mxu0
  %v1614 = vadd.f32 0.0, %v1613
  %v1615 = vpop.f32.mrb[0].mxu0
  %1616 = vdwg.mxu0
  %v1618 = vsel %vm1543, %v1462, 0
  %1620 = vmatprep.subr.mxu0 0.0
  %1621 = vmatpush1.msra.mxu0 %v1539
  %1622 = vmatprep.subr.mxu0 0.0
  %1623 = vmatpush1.msra.mxu0 %v1540
  %1624 = vmatprep.subr.mxu0 0.0
  %1625 = vmatpush1.msra.mxu0 0.0
  %1626 = vmatprep.subr.mxu0 0.0
  %1627 = vmatpush1.msra.mxu0 0.0
  %1628 = vmatprep.subr.mxu0 0.0
  %1629 = vmatpush1.msra.mxu0 0.0
  %1630 = vmatprep.subr.mxu0 0.0
  %1631 = vmatpush1.msra.mxu0 0.0
  %1632 = vmatprep.subr.mxu0 0.0
  %1633 = vmatpush1.msra.mxu0 0.0
  %1634 = vmatprep.subr.mxu0 0.0
  %1635 = vmatpush1.msra.mxu0 0.0
  %1636 = vmatprep.subr.mxu0 0.0
  %1637 = vmatpush1.msra.mxu0 0.0
  %1638 = vmatprep.subr.mxu0 0.0
  %1639 = vmatpush1.msra.mxu0 0.0
  %1640 = vmatprep.subr.mxu0 0.0
  %1641 = vmatpush1.msra.mxu0 0.0
  %1642 = vmatprep.subr.mxu0 0.0
  %1643 = vmatpush1.msra.mxu0 0.0
  %1644 = vmatprep.subr.mxu0 0.0
  %1645 = vmatpush1.msra.mxu0 0.0
  %1646 = vmatprep.subr.mxu0 0.0
  %1647 = vmatpush1.msra.mxu0 0.0
  %1648 = vmatprep.subr.mxu0 0.0
  %1649 = vmatpush1.msra.mxu0 0.0
  %1650 = vmatprep.subr.mxu0 0.0
  %1651 = vmatpush1.msra.mxu0 0.0
  %1652 = vmatprep.subr.mxu0 0.0
  %1653 = vmatpush1.msra.mxu0 0.0
  %1654 = vmatprep.subr.mxu0 0.0
  %1655 = vmatpush1.msra.mxu0 0.0
  %1656 = vmatprep.subr.mxu0 0.0
  %1657 = vmatpush1.msra.mxu0 0.0
  %1658 = vmatprep.subr.mxu0 0.0
  %1659 = vmatpush1.msra.mxu0 0.0
  %1660 = vmatprep.subr.mxu0 0.0
  %1661 = vmatpush1.msra.mxu0 0.0
  %1662 = vmatprep.subr.mxu0 0.0
  %1663 = vmatpush1.msra.mxu0 0.0
  %1664 = vmatprep.subr.mxu0 0.0
  %1665 = vmatpush1.msra.mxu0 0.0
  %1666 = vmatprep.subr.mxu0 0.0
  %1667 = vmatpush1.msra.mxu0 0.0
  %1668 = vmatprep.subr.mxu0 0.0
  %1669 = vmatpush1.msra.mxu0 0.0
  %1670 = vmatprep.subr.mxu0 0.0
  %1671 = vmatpush1.msra.mxu0 0.0
  %1672 = vmatprep.subr.mxu0 0.0
  %1673 = vmatpush1.msra.mxu0 0.0
  %1674 = vmatprep.subr.mxu0 0.0
  %1675 = vmatpush1.msra.mxu0 0.0
  %1676 = vmatprep.subr.mxu0 0.0
  %1677 = vmatpush1.msra.mxu0 0.0
  %1678 = vmatprep.subr.mxu0 0.0
  %1679 = vmatpush1.msra.mxu0 0.0
  %1680 = vmatprep.subr.mxu0 0.0
  %1681 = vmatpush1.msra.mxu0 0.0
  %1682 = vmatprep.subr.mxu0 0.0
  %1683 = vmatpush1.msra.mxu0 0.0
  %1684 = vmatprep.mubr.f32.mxu0 0.0
  %1685 = vmatmul.mubr.f32.gmra.mrb[0].mxu0 %v1618
  %v1686 = vpop.f32.mrb[0].mxu0
  %v1687 = vadd.f32 %v1614, %v1686
  %v1688 = vpop.f32.mrb[0].mxu0
  %1689 = vdwg.mxu0
  %v1690 = vld [vmem:[%s6] sm:$0x1f]
  %1692 = vset.pattern.permute.xlu0 0
  %1693 = vperm.xlu0 %1692, %v1690
  %v1694 = vpop.permute.xlu0 %1693
  %v1696 = vadd.f32 %v1687, %v1694
  %v1698 = vrot.slane %v1696, 1
  %v1700 = vmax.f32 %v1696, %v1698
  %v1701 = vrot.slane %v1696, 2
  %v1703 = vmax.f32 %v1700, %v1701
  %v1704 = vrot.slane %v1696, 3
  %v1706 = vmax.f32 %v1703, %v1704
  %v1707 = vrot.slane %v1696, 4
  %v1709 = vmax.f32 %v1706, %v1707
  %v1710 = vlaneseq
  %v1711 = vshrl.u32 %v1710, 7
  %v1712 = vsub.s32 0, %v1711
  %v1713 = vrot.slane %v1709, %v1712
  %v1714 = vsub.f32 %v1696, %v1713
  %v1715 = vmul.f32 %v1714, 1.442695
  %v1716 = vpow.pop %v1715
  %v1718 = vrot.slane %v1716, 1
  %v1720 = vadd.f32 %v1716, %v1718
  %v1721 = vrot.slane %v1716, 2
  %v1723 = vadd.f32 %v1720, %v1721
  %v1724 = vrot.slane %v1716, 3
  %v1726 = vadd.f32 %v1723, %v1724
  %v1727 = vrot.slane %v1716, 4
  %v1729 = vadd.f32 %v1726, %v1727
  %v1730 = vrcp.pop %v1729
  %v1731 = vlaneseq
  %v1732 = vshrl.u32 %v1731, 7
  %v1733 = vsub.s32 0, %v1732
  %v1734 = vrot.slane %v1730, %v1733
  %v1735 = vmul.f32 %v1716, %v1734
  %1736 = vst [vmem:[%s9] sm:$0x1f] %v1735
  // Predicated region
  $region38: #{my_model_forward.1} parent=0 // pred_check
    _
  $region39: #{my_model_forward.1} parent=0 // pred_check_branch
    %1738 = sbr.rel (0) target = $region41
  $region40: #{my_model_forward.1} parent=0 // pred_region
    _
  $region41: #{my_model_forward.1} parent=0 // pred_fallthru
    _
  // Predicated region
  $region42: #{my_model_forward.1} parent=0 // pred_check
    _
  $region43: #{my_model_forward.1} parent=0 // pred_check_branch
    %1740 = sbr.rel (0) target = $region45
  $region44: #{my_model_forward.1} parent=0 // pred_region
    _
  $region45: #{my_model_forward.1} parent=0 // pred_fallthru
    _

</llo_original>
